<compile_context>
chip_gen: v7x
topology: tpu7x:2x2x1
jax: 0.10.0
libtpu: 0.0.40
codegen_flags: <defaults>
</compile_context>

<pallas_src>
import functools

import jax
import jax.numpy as jnp
from jax.experimental import pallas as pl
from jax.experimental.pallas import tpu as pltpu

EPS = 1e-5

# Older jax releases name this TPUCompilerParams.
_CompilerParams = getattr(pltpu, "CompilerParams", None) or getattr(
    pltpu, "TPUCompilerParams")


def _round_up(x, m):
    return (x + m - 1) // m * m


def _cdiv(a, b):
    return -(-a // b)


def _vmem_limit_bytes():
    """Generation-aware scoped-VMEM limit: ~3/4 of physical, capped at 96 MiB.

    v7x (64 MiB physical VMEM) -> 48 MiB; v5e / v6e (128 MiB) -> 96 MiB.
    Falls back to 48 MiB when the hardware query is unavailable.
    """
    cap = 0
    try:
        info_fn = getattr(pltpu, "get_tpu_info", None)
        if info_fn is not None:
            info = info_fn()
            cap = int(getattr(info, "vmem_capacity_bytes", 0)
                      or getattr(info, "vmem_bytes", 0) or 0)
    except Exception:
        cap = 0
    if cap <= 0:
        cap = 64 * 1024 * 1024          # conservative: v7x physical VMEM
    return int(min(cap * 3 // 4, 96 * 1024 * 1024))


_VMEM_LIMIT = _vmem_limit_bytes()
# Tile-data budget (leaves headroom under the scoped limit for Mosaic scratch).
_TILE_BUDGET = _VMEM_LIMIT // 2
_W_RESIDENT_BYTES = min(_TILE_BUDGET // 3, 16 * 1024 * 1024)
_ROW_TILE_CAP = 1024 if _TILE_BUDGET >= 40 * 1024 * 1024 else 512


def _pick_tiles(M, K, C):
    """Lane/sublane-aligned tiles with minimal padding, sized for VMEM."""
    # Channels: pad only to the next multiple of 128; tc divides Cpad.
    Cpad = _round_up(C, 128)
    if Cpad <= 512:
        tc = Cpad
    else:
        tc = next(t for t in (512, 384, 256, 128) if Cpad % t == 0)
    ct = Cpad // tc

    # Reduction: pad only to the next multiple of 128; tk divides Kpad.
    Kpad = _round_up(K, 128)

    # Rows: pad only to a multiple of 8 per tile; split into >= 2 M tiles
    # whenever possible so both v7x TensorCores get work (harmless elsewhere).
    M8 = _round_up(M, 8)
    mt = max(_cdiv(M8, _ROW_TILE_CAP), 2 if M8 >= 16 else 1)
    tm = _round_up(_cdiv(M8, mt), 8)
    Mpad = tm * mt

    # Weight residency: keep the whole bf16 weight matrix in VMEM when small
    # (all ResNet BasicBlock layers are <= ~4.5 MiB).
    w_res_bytes = Kpad * Cpad * 2 * 2           # bf16, double-buffered
    w_resident = (ct == 1) and (w_res_bytes <= _W_RESIDENT_BYTES)

    def fits(tk_):
        patch = tm * tk_ * 2 * 2                # bf16 patch tile, 2 buffers
        wmem = w_res_bytes if w_resident else tk_ * tc * 2 * 2
        zout = tm * tc * 2 * 2                  # bf16 output tile, 2 buffers
        stats = 2 * 8 * tc * 4 * 2              # f32 psum/pssq, 2 buffers
        acc = tm * tc * 4                       # f32 accumulator scratch
        return patch + wmem + zout + stats + acc <= _TILE_BUDGET

    if fits(Kpad):
        tk = Kpad
    else:
        tk = next((t for t in (1024, 768, 512, 384, 256, 128)
                   if Kpad % t == 0 and fits(t)), 128)

    return dict(M=M, Mpad=Mpad, Kpad=Kpad, Cpad=Cpad, tm=tm, tk=tk, tc=tc,
                mt=mt, ct=ct, kt=Kpad // tk, w_resident=w_resident)


# ----------------------------------------------------------------------------
# Phase 1: tiled matmul + per-tile BN partial statistics
# ----------------------------------------------------------------------------
def _matmul_stats_kernel(p_ref, w_ref, z_ref, sum_ref, ssq_ref, acc_ref, *,
                         tk, w_resident):
    k = pl.program_id(2)

    @pl.when(k == 0)
    def _():
        acc_ref[...] = jnp.zeros_like(acc_ref)

    if w_resident and tk != w_ref.shape[0]:
        # Full weight matrix resident in VMEM; slice the K chunk in place.
        w = w_ref[pl.ds(pl.multiple_of(k * tk, 128), tk), :]
    else:
        w = w_ref[...]
    acc_ref[...] += jnp.dot(p_ref[...], w, preferred_element_type=jnp.float32)

    @pl.when(k == pl.num_programs(2) - 1)
    def _():
        acc = acc_ref[...]
        z_ref[...] = acc.astype(z_ref.dtype)               # bf16 store
        psum = jnp.sum(acc, axis=0, keepdims=True)          # (1, tc)
        pssq = jnp.sum(acc * acc, axis=0, keepdims=True)    # (1, tc)
        sum_ref[...] = jnp.broadcast_to(psum, sum_ref.shape)
        ssq_ref[...] = jnp.broadcast_to(pssq, ssq_ref.shape)


def conv_matmul_stats(patches_bf16, w_oihw):
    """patches: (M, K) bf16 im2col matrix; w_oihw: (Cout, Cin, kh, kw).

    Returns (z, mean, var, tiles): z is the raw conv output in bf16, padded to
    (Mpad, Cpad); mean/var are training-mode (biased) BN statistics over the
    true M rows (padded rows contribute exactly zero), computed in f32.
    """
    M, K = patches_bf16.shape
    C = w_oihw.shape[0]
    t = _pick_tiles(M, K, C)
    Mpad, Kpad, Cpad = t["Mpad"], t["Kpad"], t["Cpad"]
    tm, tk, tc = t["tm"], t["tk"], t["tc"]
    mt, ct, kt = t["mt"], t["ct"], t["kt"]

    p = jnp.pad(patches_bf16, ((0, Mpad - M), (0, Kpad - K)))
    w = jnp.transpose(w_oihw, (2, 3, 1, 0)).reshape(-1, C)   # (dy, dx, cin) rows
    wb = jnp.pad(w.astype(jnp.bfloat16), ((0, Kpad - K), (0, Cpad - C)))

    if t["w_resident"]:
        # Constant index_map -> the weight matrix is DMA'd from HBM once and
        # stays VMEM-resident for the whole grid.
        w_spec = pl.BlockSpec((Kpad, Cpad), lambda i, j, k: (0, 0))
    else:
        w_spec = pl.BlockSpec((tk, tc), lambda i, j, k: (k, j))

    kernel = functools.partial(_matmul_stats_kernel, tk=tk,
                               w_resident=t["w_resident"])

    z, psum, pssq = pl.pallas_call(
        kernel,
        out_shape=(jax.ShapeDtypeStruct((Mpad, Cpad), jnp.bfloat16),
                   jax.ShapeDtypeStruct((8 * mt, Cpad), jnp.float32),
                   jax.ShapeDtypeStruct((8 * mt, Cpad), jnp.float32)),
        grid_spec=pltpu.PrefetchScalarGridSpec(
            num_scalar_prefetch=0,
            grid=(mt, ct, kt),
            in_specs=[
                pl.BlockSpec((tm, tk), lambda i, j, k: (i, k)),
                w_spec,
            ],
            out_specs=(
                pl.BlockSpec((tm, tc), lambda i, j, k: (i, j)),
                pl.BlockSpec((8, tc), lambda i, j, k: (i, j)),
                pl.BlockSpec((8, tc), lambda i, j, k: (i, j)),
            ),
            scratch_shapes=[pltpu.VMEM((tm, tc), jnp.float32)]),
        compiler_params=_CompilerParams(
            dimension_semantics=("parallel", "parallel", "arbitrary"),
            vmem_limit_bytes=_VMEM_LIMIT),
        cost_estimate=pl.CostEstimate(
            flops=2 * Mpad * Kpad * Cpad,
            transcendentals=0,
            bytes_accessed=int(p.size * 2
                               + wb.size * 2 * (1 if t["w_resident"] else mt)
                               + Mpad * Cpad * 2 + 2 * 8 * mt * Cpad * 4)),
    )(p, wb)

    total = jnp.sum(psum.reshape(mt, 8, Cpad)[:, 0, :], axis=0)
    total_sq = jnp.sum(pssq.reshape(mt, 8, Cpad)[:, 0, :], axis=0)
    mean = total / M
    # NOTE: E[x^2]-mean^2 in f32 can cancel for huge activations; clamped >= 0.
    var = jnp.maximum(total_sq / M - mean * mean, 0.0)
    return z, mean, var, t


def _bn_scale_shift(mean, var, gamma, beta, Cpad):
    C = gamma.shape[0]
    g = jnp.pad(gamma.astype(jnp.float32), (0, Cpad - C))
    b = jnp.pad(beta.astype(jnp.float32), (0, Cpad - C))
    scale = g * jax.lax.rsqrt(var + EPS)
    shift = b - mean * scale
    return scale.reshape(1, Cpad), shift.reshape(1, Cpad)


# ----------------------------------------------------------------------------
# Phase 2: lane-dense BN epilogue kernels (bf16 in / bf16 out, f32 math)
# ----------------------------------------------------------------------------
def _bn_relu_kernel(z_ref, scale_ref, shift_ref, o_ref):
    y = z_ref[...].astype(jnp.float32) * scale_ref[...] + shift_ref[...]
    o_ref[...] = jnp.maximum(y, 0.0).astype(o_ref.dtype)


def _bn_add_bn_relu_kernel(z_ref, zs_ref, scale_ref, shift_ref,
                           sscale_ref, sshift_ref, o_ref):
    y = z_ref[...].astype(jnp.float32) * scale_ref[...] + shift_ref[...]
    y = y + zs_ref[...].astype(jnp.float32) * sscale_ref[...] + sshift_ref[...]
    o_ref[...] = jnp.maximum(y, 0.0).astype(o_ref.dtype)


def _bn_add_relu_kernel(z_ref, x_ref, scale_ref, shift_ref, o_ref):
    y = z_ref[...].astype(jnp.float32) * scale_ref[...] + shift_ref[...]
    y = y + x_ref[...].astype(jnp.float32)
    o_ref[...] = jnp.maximum(y, 0.0).astype(o_ref.dtype)


def _pick_epilogue_rows(Mpad, Cpad, n_mat):
    # bf16 matrix inputs + output, double-buffered.
    bytes_per_row = (n_mat + 1) * Cpad * 2 * 2
    if Mpad * bytes_per_row <= _TILE_BUDGET:
        return Mpad
    rows = max(8, _TILE_BUDGET // bytes_per_row // 8 * 8)
    while rows > 8 and Mpad % rows:
        rows -= 8
    return rows


def _epilogue_call(kernel, mat_inputs, row_inputs, Mpad, Cpad):
    tm_e = _pick_epilogue_rows(Mpad, Cpad, len(mat_inputs))
    mat_spec = pl.BlockSpec((tm_e, Cpad), lambda i: (i, 0))
    row_spec = pl.BlockSpec((1, Cpad), lambda i: (0, 0))
    return pl.pallas_call(
        kernel,
        out_shape=jax.ShapeDtypeStruct((Mpad, Cpad), jnp.bfloat16),
        grid_spec=pltpu.PrefetchScalarGridSpec(
            num_scalar_prefetch=0,
            grid=(Mpad // tm_e,),
            in_specs=[mat_spec] * len(mat_inputs) + [row_spec] * len(row_inputs),
            out_specs=mat_spec),
        compiler_params=_CompilerParams(
            dimension_semantics=("parallel",),
            vmem_limit_bytes=_VMEM_LIMIT),
    )(*mat_inputs, *row_inputs)


# ----------------------------------------------------------------------------
# Glue: im2col + forward wiring (NCHW in / NCHW out)
# ----------------------------------------------------------------------------
def im2col(x_nhwc, ksize, stride, padding):
    N, H, W, C = x_nhwc.shape
    xp = jnp.pad(x_nhwc, ((0, 0), (padding, padding), (padding, padding), (0, 0)))
    Ho = (H + 2 * padding - ksize) // stride + 1
    Wo = (W + 2 * padding - ksize) // stride + 1
    cols = []
    for dy in range(ksize):
        for dx in range(ksize):
            cols.append(xp[:, dy:dy + (Ho - 1) * stride + 1:stride,
                           dx:dx + (Wo - 1) * stride + 1:stride, :])
    patches = jnp.concatenate(cols, axis=-1)          # (N, Ho, Wo, k*k*C)
    return patches.reshape(N * Ho * Wo, ksize * ksize * C), Ho, Wo


def basic_block_forward(x_nchw, params, stride):
    # NHWC, bf16 activations; f32 accumulation / statistics inside the kernels.
    x = jnp.transpose(x_nchw, (0, 2, 3, 1)).astype(jnp.bfloat16)
    N, H, W, Cin = x.shape
    Cout = params["w1"].shape[0]

    # ---- conv1 (3x3, stride, no bias) + BN + ReLU ----
    p1, Ho, Wo = im2col(x, 3, stride, 1)
    z1, mean1, var1, t1 = conv_matmul_stats(p1, params["w1"])
    sc1, sh1 = _bn_scale_shift(mean1, var1, params["g1"], params["b1"], t1["Cpad"])
    out1 = _epilogue_call(_bn_relu_kernel, (z1,), (sc1, sh1),
                          t1["Mpad"], t1["Cpad"])
    out1 = out1[:t1["M"], :Cout].reshape(N, Ho, Wo, Cout)

    # ---- conv2 (3x3, stride 1, no bias): raw output + BN statistics ----
    p2, _, _ = im2col(out1, 3, 1, 1)
    z2, mean2, var2, t2 = conv_matmul_stats(p2, params["w2"])
    M2, Mpad2, Cpad2 = t2["M"], t2["Mpad"], t2["Cpad"]
    sc2, sh2 = _bn_scale_shift(mean2, var2, params["g2"], params["b2"], Cpad2)

    if stride != 1 or Cin != Cout:
        # Conv shortcut: 1x1 strided conv + BN.  The conv bias (a per-channel
        # constant) is removed exactly by training-mode BN mean subtraction,
        # so it is dropped from the matmul.
        ps, _, _ = im2col(x, 1, stride, 0)
        zs, means, varss, _ = conv_matmul_stats(ps, params["ws"])
        scs, shs = _bn_scale_shift(means, varss, params["gs"], params["bs"], Cpad2)
        out = _epilogue_call(_bn_add_bn_relu_kernel, (z2, zs),
                             (sc2, sh2, scs, shs), Mpad2, Cpad2)
    else:
        # Identity shortcut: dedicated kernel adds the padded bf16 input
        # directly (no fake x1/+0 BN, no zero-filled HBM round trip).
        x_flat = jnp.pad(x.reshape(M2, Cin), ((0, Mpad2 - M2), (0, Cpad2 - Cin)))
        out = _epilogue_call(_bn_add_relu_kernel, (z2, x_flat),
                             (sc2, sh2), Mpad2, Cpad2)

    out = out[:M2, :Cout].astype(jnp.float32).reshape(N, Ho, Wo, Cout)
    return jnp.transpose(out, (0, 3, 1, 2))           # back to NCHW


# ----------------------------------------------------------------------------
# Pure-JAX reference.  It models the kernel's precision policy: bf16 matmul
# inputs, f32 accumulation and f32 BN statistics, bf16-stored intermediate
# activations.  (The shortcut 1x1-conv bias is a per-channel constant that
# training-mode BN mean-subtraction removes exactly.)
# ----------------------------------------------------------------------------
def _conv_nhwc(x, w_oihw, stride, padding):
    return jax.lax.conv_general_dilated(
        x.astype(jnp.bfloat16),
        jnp.transpose(w_oihw, (2, 3, 1, 0)).astype(jnp.bfloat16),
        (stride, stride), [(padding, padding), (padding, padding)],
        dimension_numbers=("NHWC", "HWIO", "NHWC"),
        preferred_element_type=jnp.float32)


def _bn_train(y_f32, gamma, beta):
    mean = jnp.mean(y_f32, axis=(0, 1, 2))
    var = jnp.maximum(jnp.mean(y_f32 * y_f32, axis=(0, 1, 2)) - mean * mean, 0.0)
    scale = gamma * jax.lax.rsqrt(var + EPS)
    # Statistics from f32; the stored conv output is bf16 (as in the kernel).
    y_q = y_f32.astype(jnp.bfloat16).astype(jnp.float32)
    return y_q * scale + (beta - mean * scale)


def reference_forward(x_nchw, params, stride):
    x = jnp.transpose(x_nchw, (0, 2, 3, 1)).astype(jnp.bfloat16).astype(jnp.float32)
    Cin, Cout = x.shape[-1], params["w1"].shape[0]
    out = jax.nn.relu(_bn_train(_conv_nhwc(x, params["w1"], stride, 1),
                                params["g1"], params["b1"]))
    out = out.astype(jnp.bfloat16).astype(jnp.float32)   # bf16-stored activation
    out = _bn_train(_conv_nhwc(out, params["w2"], 1, 1), params["g2"], params["b2"])
    if stride != 1 or Cin != Cout:
        sc = _conv_nhwc(x, params["ws"], stride, 0) + params["bs_conv"]
        sc = _bn_train(sc, params["gs"], params["bs"])
    else:
        sc = x
    return jnp.transpose(jax.nn.relu(out + sc), (0, 3, 1, 2))


# ----------------------------------------------------------------------------
# Main
# ----------------------------------------------------------------------------
if __name__ == "__main__":
    fwd = jax.jit(basic_block_forward, static_argnames=("stride",))

    # Case 1: conv-shortcut path (stride=2, in_planes != planes).
    N, in_planes, planes, H, W, stride = 2, 4, 8, 16, 16, 2
    ks = jax.random.split(jax.random.PRNGKey(0), 8)
    params = {
        "w1": jax.random.normal(ks[0], (planes, in_planes, 3, 3), jnp.float32) * 0.15,
        "g1": 1.0 + 0.1 * jax.random.normal(ks[1], (planes,), jnp.float32),
        "b1": 0.1 * jax.random.normal(ks[2], (planes,), jnp.float32),
        "w2": jax.random.normal(ks[3], (planes, planes, 3, 3), jnp.float32) * 0.12,
        "g2": 1.0 + 0.1 * jax.random.normal(ks[4], (planes,), jnp.float32),
        "b2": 0.1 * jax.random.normal(ks[5], (planes,), jnp.float32),
        "ws": jax.random.normal(ks[6], (planes, in_planes, 1, 1), jnp.float32) * 0.5,
        "bs_conv": 0.1 * jax.random.normal(ks[7], (planes,), jnp.float32),
        "gs": jnp.ones((planes,), jnp.float32),
        "bs": jnp.zeros((planes,), jnp.float32),
    }
    x = jax.random.normal(jax.random.PRNGKey(1), (N, in_planes, H, W), jnp.float32)

    out = jax.block_until_ready(fwd(x, params, stride=stride))
    ref = jax.block_until_ready(reference_forward(x, params, stride))
    assert out.shape == (N, planes, H // stride, W // stride), out.shape
    err = float(jnp.max(jnp.abs(out - ref)))
    # bf16-stored activations can differ by ~1-2 bf16 ulps x BN scale per
    # element vs. the reference; 3e-2 bounds that while catching real bugs.
    assert jnp.allclose(out, ref, atol=3e-2, rtol=3e-2), err

    # Case 2: identity-shortcut path (stride=1, in_planes == planes).
    ks2 = jax.random.split(jax.random.PRNGKey(2), 6)
    params_id = {
        "w1": jax.random.normal(ks2[0], (planes, planes, 3, 3), jnp.float32) * 0.12,
        "g1": 1.0 + 0.1 * jax.random.normal(ks2[1], (planes,), jnp.float32),
        "b1": 0.1 * jax.random.normal(ks2[2], (planes,), jnp.float32),
        "w2": jax.random.normal(ks2[3], (planes, planes, 3, 3), jnp.float32) * 0.12,
        "g2": 1.0 + 0.1 * jax.random.normal(ks2[4], (planes,), jnp.float32),
        "b2": 0.1 * jax.random.normal(ks2[5], (planes,), jnp.float32),
    }
    x2 = jax.random.normal(jax.random.PRNGKey(3), (N, planes, H, W), jnp.float32)
    out2 = jax.block_until_ready(fwd(x2, params_id, stride=1))
    ref2 = jax.block_until_ready(reference_forward(x2, params_id, 1))
    assert out2.shape == (N, planes, H, W), out2.shape
    err2 = float(jnp.max(jnp.abs(out2 - ref2)))
    assert jnp.allclose(out2, ref2, atol=3e-2, rtol=3e-2), err2

    print("KERNEL_OK")
</pallas_src>

<mosaic_0001>
module attributes {stable_mosaic.version = 11 : i64} {
  func.func @_matmul_stats_kernel(%arg0: i32, %arg1: i32, %arg2: i32, %arg3: memref<64x128xbf16, #tpu.memory_space<vmem>>, %arg4: memref<128x128xbf16, #tpu.memory_space<vmem>>, %arg5: memref<64x128xbf16, #tpu.memory_space<vmem>>, %arg6: memref<8x128xf32, #tpu.memory_space<vmem>>, %arg7: memref<8x128xf32, #tpu.memory_space<vmem>>, %arg8: memref<64x128xf32, #tpu.memory_space<vmem>>) attributes {dimension_semantics = [#tpu.dimension_semantics<parallel>, #tpu.dimension_semantics<parallel>, #tpu.dimension_semantics<arbitrary>], iteration_bounds = array<i64: 2, 1, 1>, scalar_prefetch = 0 : i64, scratch_operands = 1 : i64, tpu.core_type = #tpu.core_type<tc>, window_params = [{transform_indices = @transform_0, window_bounds = array<i64: 64, 128>}, {pipeline_mode = #tpu.pipeline_mode<synchronous>, transform_indices = @transform_1, window_bounds = array<i64: 128, 128>}, {transform_indices = @transform_2, window_bounds = array<i64: 64, 128>}, {transform_indices = @transform_3, window_bounds = array<i64: 8, 128>}, {transform_indices = @transform_4, window_bounds = array<i64: 8, 128>}]} {
    %c0_i32 = arith.constant 0 : i32
    %0 = arith.cmpi eq, %arg2, %c0_i32 : i32
    %1 = arith.extui %0 : i1 to i32
    %c0_i32_0 = arith.constant 0 : i32
    %2 = arith.cmpi ne, %1, %c0_i32_0 : i32
    scf.if %2 {
      %cst_10 = arith.constant 0.000000e+00 : f32
      %12 = vector.broadcast %cst_10 : f32 to vector<64x128xf32>
      %c0_11 = arith.constant 0 : index
      %c0_12 = arith.constant 0 : index
      %13 = vector.load %arg8[%c0_11, %c0_12] : memref<64x128xf32, #tpu.memory_space<vmem>>, vector<64x128xf32>
      tpu.vector_store %arg8[%c0_11, %c0_12], %12 {strides = array<i32>} : memref<64x128xf32, #tpu.memory_space<vmem>>, vector<64x128xf32>,
    } else {
    }
    %c0 = arith.constant 0 : index
    %c0_1 = arith.constant 0 : index
    %3 = vector.load %arg4[%c0, %c0_1] : memref<128x128xbf16, #tpu.memory_space<vmem>>, vector<128x128xbf16>
    %c0_2 = arith.constant 0 : index
    %c0_3 = arith.constant 0 : index
    %4 = vector.load %arg8[%c0_2, %c0_3] : memref<64x128xf32, #tpu.memory_space<vmem>>, vector<64x128xf32>
    %c0_4 = arith.constant 0 : index
    %c0_5 = arith.constant 0 : index
    %5 = vector.load %arg3[%c0_4, %c0_5] : memref<64x128xbf16, #tpu.memory_space<vmem>>, vector<64x128xbf16>
    %cst = arith.constant dense<0.000000e+00> : vector<64x128xf32>
    %6 = tpu.matmul %5, %3, %cst {dimension_numbers = #tpu.dot_dimension_numbers<[1], [0], [0], [1], [0, 0, 1, 1], [], []>} : vector<64x128xbf16>, vector<128x128xbf16>, vector<64x128xf32> -> vector<64x128xf32>
    %7 = arith.addf %4, %6 : vector<64x128xf32>
    %c0_6 = arith.constant 0 : index
    %c0_7 = arith.constant 0 : index
    %8 = vector.load %arg8[%c0_6, %c0_7] : memref<64x128xf32, #tpu.memory_space<vmem>>, vector<64x128xf32>
    tpu.vector_store %arg8[%c0_6, %c0_7], %7 {strides = array<i32>} : memref<64x128xf32, #tpu.memory_space<vmem>>, vector<64x128xf32>,
    %c0_i32_8 = arith.constant 0 : i32
    %9 = arith.cmpi eq, %arg2, %c0_i32_8 : i32
    %10 = arith.extui %9 : i1 to i32
    %c0_i32_9 = arith.constant 0 : i32
    %11 = arith.cmpi ne, %10, %c0_i32_9 : i32
    scf.if %11 {
      %c0_10 = arith.constant 0 : index
      %c0_11 = arith.constant 0 : index
      %12 = vector.load %arg8[%c0_10, %c0_11] : memref<64x128xf32, #tpu.memory_space<vmem>>, vector<64x128xf32>
      %13 = arith.truncf %12 : vector<64x128xf32> to vector<64x128xbf16>
      %c0_12 = arith.constant 0 : index
      %c0_13 = arith.constant 0 : index
      %14 = vector.load %arg5[%c0_12, %c0_13] : memref<64x128xbf16, #tpu.memory_space<vmem>>, vector<64x128xbf16>
      tpu.vector_store %arg5[%c0_12, %c0_13], %13 {strides = array<i32>} : memref<64x128xbf16, #tpu.memory_space<vmem>>, vector<64x128xbf16>,
      %cst_14 = arith.constant dense<0.000000e+00> : vector<128xf32>
      %15 = vector.multi_reduction <add>, %12, %cst_14 [0] : vector<64x128xf32> to vector<128xf32>
      %16 = vector.shape_cast %15 : vector<128xf32> to vector<1x128xf32>
      %17 = arith.mulf %12, %12 : vector<64x128xf32>
      %cst_15 = arith.constant dense<0.000000e+00> : vector<128xf32>
      %18 = vector.multi_reduction <add>, %17, %cst_15 [0] : vector<64x128xf32> to vector<128xf32>
      %19 = vector.shape_cast %18 : vector<128xf32> to vector<1x128xf32>
      %20 = vector.shape_cast %16 : vector<1x128xf32> to vector<1x128xf32>
      %21 = vector.broadcast %20 : vector<1x128xf32> to vector<8x128xf32>
      %c0_16 = arith.constant 0 : index
      %c0_17 = arith.constant 0 : index
      %22 = vector.load %arg6[%c0_16, %c0_17] : memref<8x128xf32, #tpu.memory_space<vmem>>, vector<8x128xf32>
      tpu.vector_store %arg6[%c0_16, %c0_17], %21 {strides = array<i32>} : memref<8x128xf32, #tpu.memory_space<vmem>>, vector<8x128xf32>,
      %23 = vector.shape_cast %19 : vector<1x128xf32> to vector<1x128xf32>
      %24 = vector.broadcast %23 : vector<1x128xf32> to vector<8x128xf32>
      %c0_18 = arith.constant 0 : index
      %c0_19 = arith.constant 0 : index
      %25 = vector.load %arg7[%c0_18, %c0_19] : memref<8x128xf32, #tpu.memory_space<vmem>>, vector<8x128xf32>
      tpu.vector_store %arg7[%c0_18, %c0_19], %24 {strides = array<i32>} : memref<8x128xf32, #tpu.memory_space<vmem>>, vector<8x128xf32>,
    } else {
    }
    return
  }
  func.func @transform_0(%arg0: i32, %arg1: i32, %arg2: i32) -> (i32, i32) {
    %c0_i32 = arith.constant 0 : i32
    return %arg0, %arg2 : i32, i32
  }
  func.func @transform_1(%arg0: i32, %arg1: i32, %arg2: i32) -> (i32, i32) {
    %c0_i32 = arith.constant 0 : i32
    %c0_i32_0 = arith.constant 0 : i32
    %c0_i32_1 = arith.constant 0 : i32
    return %c0_i32, %c0_i32_0 : i32, i32
  }
  func.func @transform_2(%arg0: i32, %arg1: i32, %arg2: i32) -> (i32, i32) {
    %c0_i32 = arith.constant 0 : i32
    return %arg0, %arg1 : i32, i32
  }
  func.func @transform_3(%arg0: i32, %arg1: i32, %arg2: i32) -> (i32, i32) {
    %c0_i32 = arith.constant 0 : i32
    return %arg0, %arg1 : i32, i32
  }
  func.func @transform_4(%arg0: i32, %arg1: i32, %arg2: i32) -> (i32, i32) {
    %c0_i32 = arith.constant 0 : i32
    return %arg0, %arg1 : i32, i32
  }
}

module attributes {stable_mosaic.version = 11 : i64} {
  func.func @_bn_relu_kernel(%arg0: i32, %arg1: memref<128x128xbf16, #tpu.memory_space<vmem>>, %arg2: memref<1x128xf32, #tpu.memory_space<vmem>>, %arg3: memref<1x128xf32, #tpu.memory_space<vmem>>, %arg4: memref<128x128xbf16, #tpu.memory_space<vmem>>) attributes {dimension_semantics = [#tpu.dimension_semantics<parallel>], iteration_bounds = array<i64: 1>, scalar_prefetch = 0 : i64, scratch_operands = 0 : i64, tpu.core_type = #tpu.core_type<tc>, window_params = [{transform_indices = @transform_0, window_bounds = array<i64: 128, 128>}, {pipeline_mode = #tpu.pipeline_mode<synchronous>, transform_indices = @transform_1, window_bounds = array<i64: 1, 128>}, {pipeline_mode = #tpu.pipeline_mode<synchronous>, transform_indices = @transform_2, window_bounds = array<i64: 1, 128>}, {transform_indices = @transform_3, window_bounds = array<i64: 128, 128>}]} {
    %c0 = arith.constant 0 : index
    %c0_0 = arith.constant 0 : index
    %0 = vector.load %arg1[%c0, %c0_0] : memref<128x128xbf16, #tpu.memory_space<vmem>>, vector<128x128xbf16>
    %1 = arith.extf %0 : vector<128x128xbf16> to vector<128x128xf32>
    %c0_1 = arith.constant 0 : index
    %c0_2 = arith.constant 0 : index
    %2 = vector.load %arg2[%c0_1, %c0_2] : memref<1x128xf32, #tpu.memory_space<vmem>>, vector<1x128xf32>
    %3 = vector.broadcast %2 : vector<1x128xf32> to vector<128x128xf32>
    %4 = arith.mulf %1, %3 : vector<128x128xf32>
    %c0_3 = arith.constant 0 : index
    %c0_4 = arith.constant 0 : index
    %5 = vector.load %arg3[%c0_3, %c0_4] : memref<1x128xf32, #tpu.memory_space<vmem>>, vector<1x128xf32>
    %6 = vector.broadcast %5 : vector<1x128xf32> to vector<128x128xf32>
    %7 = arith.addf %4, %6 : vector<128x128xf32>
    %cst = arith.constant 0.000000e+00 : f32
    %8 = vector.broadcast %cst : f32 to vector<128x128xf32>
    %9 = arith.maximumf %7, %8 : vector<128x128xf32>
    %10 = arith.truncf %9 : vector<128x128xf32> to vector<128x128xbf16>
    %c0_5 = arith.constant 0 : index
    %c0_6 = arith.constant 0 : index
    %11 = vector.load %arg4[%c0_5, %c0_6] : memref<128x128xbf16, #tpu.memory_space<vmem>>, vector<128x128xbf16>
    tpu.vector_store %arg4[%c0_5, %c0_6], %10 {strides = array<i32>} : memref<128x128xbf16, #tpu.memory_space<vmem>>, vector<128x128xbf16>,
    return
  }
  func.func @transform_0(%arg0: i32) -> (i32, i32) {
    %c0_i32 = arith.constant 0 : i32
    %c0_i32_0 = arith.constant 0 : i32
    return %arg0, %c0_i32 : i32, i32
  }
  func.func @transform_1(%arg0: i32) -> (i32, i32) {
    %c0_i32 = arith.constant 0 : i32
    %c0_i32_0 = arith.constant 0 : i32
    %c0_i32_1 = arith.constant 0 : i32
    return %c0_i32, %c0_i32_0 : i32, i32
  }
  func.func @transform_2(%arg0: i32) -> (i32, i32) {
    %c0_i32 = arith.constant 0 : i32
    %c0_i32_0 = arith.constant 0 : i32
    %c0_i32_1 = arith.constant 0 : i32
    return %c0_i32, %c0_i32_0 : i32, i32
  }
  func.func @transform_3(%arg0: i32) -> (i32, i32) {
    %c0_i32 = arith.constant 0 : i32
    %c0_i32_0 = arith.constant 0 : i32
    return %arg0, %c0_i32 : i32, i32
  }
}

module attributes {stable_mosaic.version = 11 : i64} {
  func.func @_bn_add_bn_relu_kernel(%arg0: i32, %arg1: memref<128x128xbf16, #tpu.memory_space<vmem>>, %arg2: memref<128x128xbf16, #tpu.memory_space<vmem>>, %arg3: memref<1x128xf32, #tpu.memory_space<vmem>>, %arg4: memref<1x128xf32, #tpu.memory_space<vmem>>, %arg5: memref<1x128xf32, #tpu.memory_space<vmem>>, %arg6: memref<1x128xf32, #tpu.memory_space<vmem>>, %arg7: memref<128x128xbf16, #tpu.memory_space<vmem>>) attributes {dimension_semantics = [#tpu.dimension_semantics<parallel>], iteration_bounds = array<i64: 1>, scalar_prefetch = 0 : i64, scratch_operands = 0 : i64, tpu.core_type = #tpu.core_type<tc>, window_params = [{transform_indices = @transform_0, window_bounds = array<i64: 128, 128>}, {transform_indices = @transform_1, window_bounds = array<i64: 128, 128>}, {pipeline_mode = #tpu.pipeline_mode<synchronous>, transform_indices = @transform_2, window_bounds = array<i64: 1, 128>}, {pipeline_mode = #tpu.pipeline_mode<synchronous>, transform_indices = @transform_3, window_bounds = array<i64: 1, 128>}, {pipeline_mode = #tpu.pipeline_mode<synchronous>, transform_indices = @transform_4, window_bounds = array<i64: 1, 128>}, {pipeline_mode = #tpu.pipeline_mode<synchronous>, transform_indices = @transform_5, window_bounds = array<i64: 1, 128>}, {transform_indices = @transform_6, window_bounds = array<i64: 128, 128>}]} {
    %c0 = arith.constant 0 : index
    %c0_0 = arith.constant 0 : index
    %0 = vector.load %arg1[%c0, %c0_0] : memref<128x128xbf16, #tpu.memory_space<vmem>>, vector<128x128xbf16>
    %1 = arith.extf %0 : vector<128x128xbf16> to vector<128x128xf32>
    %c0_1 = arith.constant 0 : index
    %c0_2 = arith.constant 0 : index
    %2 = vector.load %arg3[%c0_1, %c0_2] : memref<1x128xf32, #tpu.memory_space<vmem>>, vector<1x128xf32>
    %3 = vector.broadcast %2 : vector<1x128xf32> to vector<128x128xf32>
    %4 = arith.mulf %1, %3 : vector<128x128xf32>
    %c0_3 = arith.constant 0 : index
    %c0_4 = arith.constant 0 : index
    %5 = vector.load %arg4[%c0_3, %c0_4] : memref<1x128xf32, #tpu.memory_space<vmem>>, vector<1x128xf32>
    %6 = vector.broadcast %5 : vector<1x128xf32> to vector<128x128xf32>
    %7 = arith.addf %4, %6 : vector<128x128xf32>
    %c0_5 = arith.constant 0 : index
    %c0_6 = arith.constant 0 : index
    %8 = vector.load %arg2[%c0_5, %c0_6] : memref<128x128xbf16, #tpu.memory_space<vmem>>, vector<128x128xbf16>
    %9 = arith.extf %8 : vector<128x128xbf16> to vector<128x128xf32>
    %c0_7 = arith.constant 0 : index
    %c0_8 = arith.constant 0 : index
    %10 = vector.load %arg5[%c0_7, %c0_8] : memref<1x128xf32, #tpu.memory_space<vmem>>, vector<1x128xf32>
    %11 = vector.broadcast %10 : vector<1x128xf32> to vector<128x128xf32>
    %12 = arith.mulf %9, %11 : vector<128x128xf32>
    %13 = arith.addf %7, %12 : vector<128x128xf32>
    %c0_9 = arith.constant 0 : index
    %c0_10 = arith.constant 0 : index
    %14 = vector.load %arg6[%c0_9, %c0_10] : memref<1x128xf32, #tpu.memory_space<vmem>>, vector<1x128xf32>
    %15 = vector.broadcast %14 : vector<1x128xf32> to vector<128x128xf32>
    %16 = arith.addf %13, %15 : vector<128x128xf32>
    %cst = arith.constant 0.000000e+00 : f32
    %17 = vector.broadcast %cst : f32 to vector<128x128xf32>
    %18 = arith.maximumf %16, %17 : vector<128x128xf32>
    %19 = arith.truncf %18 : vector<128x128xf32> to vector<128x128xbf16>
    %c0_11 = arith.constant 0 : index
    %c0_12 = arith.constant 0 : index
    %20 = vector.load %arg7[%c0_11, %c0_12] : memref<128x128xbf16, #tpu.memory_space<vmem>>, vector<128x128xbf16>
    tpu.vector_store %arg7[%c0_11, %c0_12], %19 {strides = array<i32>} : memref<128x128xbf16, #tpu.memory_space<vmem>>, vector<128x128xbf16>,
    return
  }
  func.func @transform_0(%arg0: i32) -> (i32, i32) {
    %c0_i32 = arith.constant 0 : i32
    %c0_i32_0 = arith.constant 0 : i32
    return %arg0, %c0_i32 : i32, i32
  }
  func.func @transform_1(%arg0: i32) -> (i32, i32) {
    %c0_i32 = arith.constant 0 : i32
    %c0_i32_0 = arith.constant 0 : i32
    return %arg0, %c0_i32 : i32, i32
  }
  func.func @transform_2(%arg0: i32) -> (i32, i32) {
    %c0_i32 = arith.constant 0 : i32
    %c0_i32_0 = arith.constant 0 : i32
    %c0_i32_1 = arith.constant 0 : i32
    return %c0_i32, %c0_i32_0 : i32, i32
  }
  func.func @transform_3(%arg0: i32) -> (i32, i32) {
    %c0_i32 = arith.constant 0 : i32
    %c0_i32_0 = arith.constant 0 : i32
    %c0_i32_1 = arith.constant 0 : i32
    return %c0_i32, %c0_i32_0 : i32, i32
  }
  func.func @transform_4(%arg0: i32) -> (i32, i32) {
    %c0_i32 = arith.constant 0 : i32
    %c0_i32_0 = arith.constant 0 : i32
    %c0_i32_1 = arith.constant 0 : i32
    return %c0_i32, %c0_i32_0 : i32, i32
  }
  func.func @transform_5(%arg0: i32) -> (i32, i32) {
    %c0_i32 = arith.constant 0 : i32
    %c0_i32_0 = arith.constant 0 : i32
    %c0_i32_1 = arith.constant 0 : i32
    return %c0_i32, %c0_i32_0 : i32, i32
  }
  func.func @transform_6(%arg0: i32) -> (i32, i32) {
    %c0_i32 = arith.constant 0 : i32
    %c0_i32_0 = arith.constant 0 : i32
    return %arg0, %c0_i32 : i32, i32
  }
}

</mosaic_0001>

<llo_original>
// kernel: basic_block_forward.6
$region0: #{basic_block_forward.6}
  #allocation0 [shape = 'u32[]', space=smem, size = 0x4, offset = 0x4, fixed_abs, tag = 'smem constant byte address 0x4 - core index']
  #allocation1 [shape = 'u32[144,128]{1,0:T(1,128)}', space=vmem, size = 0x12000, scoped, tag = 'internal scratch']
  %s0 = inlined_call_operand.vmem [shape: bf16[128,128], index: 0, kind: input, shape index: {}]
  %s1 = inlined_call_operand.vmem [shape: f32[1,128], index: 1, kind: input, shape index: {}]
  %s2 = inlined_call_operand.vmem [shape: f32[1,128], index: 2, kind: input, shape index: {}]
  %s3 = inlined_call_operand.vmem [shape: bf16[128,128], index: 3, kind: output, shape index: {}]
  %s4 = sld [smem:[#allocation0]]
  $region22: #{basic_block_forward.6} parent=0
    _
  %s6 = ssub.s32 1, %s4
  %s7 = scalar_select 0, %s6, %s4
  // Predicated region
  $region2: #{basic_block_forward.6} parent=0 // pred_check
    _
  $region3: #{basic_block_forward.6} parent=0 // pred_check_branch
    %9 = sbr.rel (0) target = $region5
  $region4: #{basic_block_forward.6} parent=0 // pred_region
    _
  $region5: #{basic_block_forward.6} parent=0 // pred_fallthru
    _
  // Predicated region
  $region6: #{basic_block_forward.6} parent=0 // pred_check
    _
  $region7: #{basic_block_forward.6} parent=0 // pred_check_branch
    %11 = sbr.rel (0) target = $region9
  $region8: #{basic_block_forward.6} parent=0 // pred_region
    _
  $region9: #{basic_block_forward.6} parent=0 // pred_fallthru
    _
  // Predicated region
  $region10: #{basic_block_forward.6} parent=0 // pred_check
    _
  $region11: #{basic_block_forward.6} parent=0 // pred_check_branch
    %13 = sbr.rel (0) target = $region13
  $region12: #{basic_block_forward.6} parent=0 // pred_region
    _
  $region13: #{basic_block_forward.6} parent=0 // pred_fallthru
    _
  %v14 = vld [vmem:[%s0] sm:$0xf]
  %v15 = vld [vmem:[%s0 + $0x4] sm:$0xf]
  %v16 = vld [vmem:[%s0 + $0x8] sm:$0xf]
  %v17 = vld [vmem:[%s0 + $0xc] sm:$0xf]
  %v18 = vld [vmem:[%s0 + $0x10] sm:$0xf]
  %v19 = vld [vmem:[%s0 + $0x14] sm:$0xf]
  %v20 = vld [vmem:[%s0 + $0x18] sm:$0xf]
  %v21 = vld [vmem:[%s0 + $0x1c] sm:$0xf]
  %v22 = vld [vmem:[%s0 + $0x20] sm:$0xf]
  %v23 = vld [vmem:[%s0 + $0x24] sm:$0xf]
  %v24 = vld [vmem:[%s0 + $0x28] sm:$0xf]
  %v25 = vld [vmem:[%s0 + $0x2c] sm:$0xf]
  %v26 = vld [vmem:[%s0 + $0x30] sm:$0xf]
  %v27 = vld [vmem:[%s0 + $0x34] sm:$0xf]
  %v28 = vld [vmem:[%s0 + $0x38] sm:$0xf]
  %v29 = vld [vmem:[%s0 + $0x3c] sm:$0xf]
  %v30 = vunpack.c.l.bf16 %v14
  %v31 = vunpack.c.l.bf16 %v15
  %v32 = vunpack.c.l.bf16 %v16
  %v33 = vunpack.c.l.bf16 %v17
  %v34 = vunpack.c.l.bf16 %v18
  %v35 = vunpack.c.l.bf16 %v19
  %v36 = vunpack.c.l.bf16 %v20
  %v37 = vunpack.c.l.bf16 %v21
  %v38 = vunpack.c.l.bf16 %v22
  %v39 = vunpack.c.l.bf16 %v23
  %v40 = vunpack.c.l.bf16 %v24
  %v41 = vunpack.c.l.bf16 %v25
  %v42 = vunpack.c.l.bf16 %v26
  %v43 = vunpack.c.l.bf16 %v27
  %v44 = vunpack.c.l.bf16 %v28
  %v45 = vunpack.c.l.bf16 %v29
  %v46 = vld [vmem:[%s1] sm:$0x1]
  %v48 = vlaneseq
  %v49 = vshrl.u32 %v48, 7
  %v50 = vsub.s32 0, %v49
  %v51 = vrot.slane %v46, %v50
  %v53 = vmul.f32 %v30, %v51
  %v54 = vmul.f32 %v31, %v51
  %v55 = vmul.f32 %v32, %v51
  %v56 = vmul.f32 %v33, %v51
  %v57 = vmul.f32 %v34, %v51
  %v58 = vmul.f32 %v35, %v51
  %v59 = vmul.f32 %v36, %v51
  %v60 = vmul.f32 %v37, %v51
  %v61 = vmul.f32 %v38, %v51
  %v62 = vmul.f32 %v39, %v51
  %v63 = vmul.f32 %v40, %v51
  %v64 = vmul.f32 %v41, %v51
  %v65 = vmul.f32 %v42, %v51
  %v66 = vmul.f32 %v43, %v51
  %v67 = vmul.f32 %v44, %v51
  %v68 = vmul.f32 %v45, %v51
  %v69 = vld [vmem:[%s2] sm:$0x1]
  %v71 = vlaneseq
  %v72 = vshrl.u32 %v71, 7
  %v73 = vsub.s32 0, %v72
  %v74 = vrot.slane %v69, %v73
  %v76 = vadd.f32 %v53, %v74
  %v77 = vadd.f32 %v54, %v74
  %v78 = vadd.f32 %v55, %v74
  %v79 = vadd.f32 %v56, %v74
  %v80 = vadd.f32 %v57, %v74
  %v81 = vadd.f32 %v58, %v74
  %v82 = vadd.f32 %v59, %v74
  %v83 = vadd.f32 %v60, %v74
  %v84 = vadd.f32 %v61, %v74
  %v85 = vadd.f32 %v62, %v74
  %v86 = vadd.f32 %v63, %v74
  %v87 = vadd.f32 %v64, %v74
  %v88 = vadd.f32 %v65, %v74
  %v89 = vadd.f32 %v66, %v74
  %v90 = vadd.f32 %v67, %v74
  %v91 = vadd.f32 %v68, %v74
  %v92 = vmax.f32 %v76, 0.0
  %v93 = vmax.f32 %v77, 0.0
  %v94 = vmax.f32 %v78, 0.0
  %v95 = vmax.f32 %v79, 0.0
  %v96 = vmax.f32 %v80, 0.0
  %v97 = vmax.f32 %v81, 0.0
  %v98 = vmax.f32 %v82, 0.0
  %v99 = vmax.f32 %v83, 0.0
  %v100 = vmax.f32 %v84, 0.0
  %v101 = vmax.f32 %v85, 0.0
  %v102 = vmax.f32 %v86, 0.0
  %v103 = vmax.f32 %v87, 0.0
  %v104 = vmax.f32 %v88, 0.0
  %v105 = vmax.f32 %v89, 0.0
  %v106 = vmax.f32 %v90, 0.0
  %v107 = vmax.f32 %v91, 0.0
  %v108 = vpack.c.bf16 %v93, %v92
  %v109 = vpack.c.bf16 %v95, %v94
  %v110 = vpack.c.bf16 %v97, %v96
  %v111 = vpack.c.bf16 %v99, %v98
  %v112 = vpack.c.bf16 %v101, %v100
  %v113 = vpack.c.bf16 %v103, %v102
  %v114 = vpack.c.bf16 %v105, %v104
  %v115 = vpack.c.bf16 %v107, %v106
  %v124 = vunpack.c.l.b16 %v108
  %v125 = vunpack.c.h.b16 %v108
  %v126 = vunpack.c.l.b16 %v109
  %v127 = vunpack.c.h.b16 %v109
  %v128 = vunpack.c.l.b16 %v110
  %v129 = vunpack.c.h.b16 %v110
  %v130 = vunpack.c.l.b16 %v111
  %v131 = vunpack.c.h.b16 %v111
  %v132 = vunpack.c.l.b16 %v112
  %v133 = vunpack.c.h.b16 %v112
  %v134 = vunpack.c.l.b16 %v113
  %v135 = vunpack.c.h.b16 %v113
  %v136 = vunpack.c.l.b16 %v114
  %v137 = vunpack.c.h.b16 %v114
  %v138 = vunpack.c.l.b16 %v115
  %v139 = vunpack.c.h.b16 %v115
  %v140 = vpack.c.b16 %v124, %v124
  %v141 = vpack.c.b16 %v125, %v125
  %v142 = vpack.c.b16 %v126, %v126
  %v143 = vpack.c.b16 %v127, %v127
  %v144 = vpack.c.b16 %v128, %v128
  %v145 = vpack.c.b16 %v129, %v129
  %v146 = vpack.c.b16 %v130, %v130
  %v147 = vpack.c.b16 %v131, %v131
  %v148 = vpack.c.b16 %v132, %v132
  %v149 = vpack.c.b16 %v133, %v133
  %v150 = vpack.c.b16 %v134, %v134
  %v151 = vpack.c.b16 %v135, %v135
  %v152 = vpack.c.b16 %v136, %v136
  %v153 = vpack.c.b16 %v137, %v137
  %v154 = vpack.c.b16 %v138, %v138
  %v155 = vpack.c.b16 %v139, %v139
  %172 = vst [vmem:[%s3] sm:$0xf] %v140
  %173 = vst [vmem:[%s3 + $0x4] sm:$0xf] %v141
  %174 = vst [vmem:[%s3 + $0x8] sm:$0xf] %v142
  %175 = vst [vmem:[%s3 + $0xc] sm:$0xf] %v143
  %176 = vst [vmem:[%s3 + $0x10] sm:$0xf] %v144
  %177 = vst [vmem:[%s3 + $0x14] sm:$0xf] %v145
  %178 = vst [vmem:[%s3 + $0x18] sm:$0xf] %v146
  %179 = vst [vmem:[%s3 + $0x1c] sm:$0xf] %v147
  %180 = vst [vmem:[%s3 + $0x20] sm:$0xf] %v148
  %181 = vst [vmem:[%s3 + $0x24] sm:$0xf] %v149
  %182 = vst [vmem:[%s3 + $0x28] sm:$0xf] %v150
  %183 = vst [vmem:[%s3 + $0x2c] sm:$0xf] %v151
  %184 = vst [vmem:[%s3 + $0x30] sm:$0xf] %v152
  %185 = vst [vmem:[%s3 + $0x34] sm:$0xf] %v153
  %186 = vst [vmem:[%s3 + $0x38] sm:$0xf] %v154
  %187 = vst [vmem:[%s3 + $0x3c] sm:$0xf] %v155
  // Predicated region
  $region14: #{basic_block_forward.6} parent=0 // pred_check
    _
  $region15: #{basic_block_forward.6} parent=0 // pred_check_branch
    %189 = sbr.rel (0) target = $region17
  $region16: #{basic_block_forward.6} parent=0 // pred_region
    _
  $region17: #{basic_block_forward.6} parent=0 // pred_fallthru
    _
  // Predicated region
  $region18: #{basic_block_forward.6} parent=0 // pred_check
    _
  $region19: #{basic_block_forward.6} parent=0 // pred_check_branch
    %191 = sbr.rel (0) target = $region21
  $region20: #{basic_block_forward.6} parent=0 // pred_region
    _
  $region21: #{basic_block_forward.6} parent=0 // pred_fallthru
    _

// kernel: basic_block_forward.5
$region0: #{basic_block_forward.5}
  #allocation0 [shape = 'u32[]', space=smem, size = 0x4, offset = 0x4, fixed_abs, tag = 'smem constant byte address 0x4 - core index']
  #allocation1 [shape = 'u32[144,128]{1,0:T(1,128)}', space=vmem, size = 0x12000, scoped, tag = 'internal scratch']
  #allocation2 [shape = 'f32[64,128]{1,0:T(8,128)}', space=vmem, size = 0x8000, scoped, tag = 'scratch operand']
  %s0 = inlined_call_operand.vmem [shape: bf16[128,128], index: 0, kind: input, shape index: {}]
  %s1 = inlined_call_operand.vmem [shape: bf16[128,128], index: 1, kind: input, shape index: {}]
  %s2 = inlined_call_operand.vmem [shape: bf16[128,128], index: 2, kind: output, shape index: {0}]
  %s3 = inlined_call_operand.vmem [shape: f32[16,128], index: 3, kind: output, shape index: {1}]
  %s4 = inlined_call_operand.vmem [shape: f32[16,128], index: 4, kind: output, shape index: {2}]
  %5 = xla_tuple %s2, %s3, %s4
  %s6 = sld [smem:[#allocation0]]
  $region65: #{basic_block_forward.5} parent=0
    _
  %s8 = ssub.s32 1, %s6
  %s9 = scalar_select 0, %s8, %s6
  loop: start=0, step=1, limit=4
  $region2: #{basic_block_forward.5} parent=0 // loop_pre_header
    _
  $region3: #{basic_block_forward.5} parent=0 // loop_header
    %s11 = sphi 0, %s15
    %p12 = scmp.ge.s32.totalorder %s11, 4
    %s18 = sphi 0, %s37
    %s19 = sphi 0, %s33
    %s20 = sphi 0, %s29
    %s21 = sphi 0, %s18
    %s22 = sphi 0, %s19
    %s23 = sphi 0, %s20
    %s24 = sphi 0, %s21
    %s25 = sphi 0, %s22
    %s26 = sphi 0, %s23
    %s42 = sphi 0, %s44
    %s45 = sphi 0, %s42
    %s46 = sphi 0, %s45
    %s62 = sphi 0, %s46
    %s66 = sphi 0, %s66
    %s68 = sphi 0, %s66
    %s69 = sphi 0, %s68
    %s83 = sphi 0, %s69
    %s91 = sphi 0, %s93
    %s94 = sphi 0, %s91
    %s95 = sphi 0, %s94
    %s111 = sphi 0, %s95
    %s119 = sphi 0, %s121
    %s122 = sphi 0, %s119
    %s123 = sphi 0, %s122
    %s139 = sphi 0, %s123
    %s147 = sphi 0, %s149
    %s150 = sphi 0, %s147
    %s151 = sphi 0, %s150
    %s167 = sphi 0, %s151
  $region4: #{basic_block_forward.5} parent=0 // loop_header_branch
    %14 = sbr.rel (%p12) target = $region8
  $region5: #{basic_block_forward.5} parent=0 // loop_body
    %s16 = ssub.s32 %s11, 1
    %s17 = ssub.s32 %s11, 2
    %s27 = sadd.s32 1, %s20
    %p28 = scmp.ge.s32.totalorder %s27, 1
    %s29 = scalar_select %p28, 0, %s27
    %s30 = sadd.s32 1, %s19
    %s31 = scalar_select %p28, %s30, %s19
    %p32 = scmp.ge.s32.totalorder %s31, 1
    %s33 = scalar_select %p32, 0, %s31
    %s34 = sadd.s32 1, %s18
    %s35 = scalar_select %p32, %s34, %s18
    %p36 = scmp.ge.s32.totalorder %s35, 2
    %s37 = scalar_select %p36, 0, %s35
    %s38 = ssub.s32 %s18, %s37
    %s39 = ssub.s32 %s20, %s29
    %s40 = sor.u32 %s38, %s39
    %p41 = scmp.eq.s32.totalorder %s40, 0
    %s43 = sadd.s32 %s42, 1
    %s44 = scalar_select %p41, %s42, %s43
    %p47 = pneg %p41
    %p48 = scmp.eq.s32.totalorder %s11, 1
    %p49 = por %p47, %p48
    %p50 = scmp.ne.s32.totalorder %s42, %s45
    %p51 = scmp.eq.s32.totalorder %s11, 0
    %p52 = por %p50, %p51
    %p53 = scmp.ne.s32.totalorder %s42, %s45
    %p54 = scmp.eq.s32.totalorder %s16, 1
    %p55 = por %p53, %p54
    %p56 = scmp.ne.s32.totalorder %s45, %s46
    %p57 = scmp.eq.s32.totalorder %s16, 0
    %p58 = por %p56, %p57
    %p59 = scmp.ne.s32.totalorder %s45, %s46
    %p60 = scmp.eq.s32.totalorder %s17, 1
    %p61 = por %p59, %p60
    %p63 = scmp.ne.s32.totalorder %s46, %s62
    %p64 = scmp.eq.s32.totalorder %s17, 0
    %p65 = por %p63, %p64
    %s67 = sadd.s32 %s66, 1
    %p70 = scmp.eq.s32.totalorder %s11, 1
    %p71 = scmp.ne.s32.totalorder %s66, %s68
    %p72 = scmp.eq.s32.totalorder %s11, 0
    %p73 = por %p71, %p72
    %p74 = scmp.ne.s32.totalorder %s66, %s68
    %p75 = scmp.eq.s32.totalorder %s16, 1
    %p76 = por %p74, %p75
    %p77 = scmp.ne.s32.totalorder %s68, %s69
    %p78 = scmp.eq.s32.totalorder %s16, 0
    %p79 = por %p77, %p78
    %p80 = scmp.ne.s32.totalorder %s68, %s69
    %p81 = scmp.eq.s32.totalorder %s17, 1
    %p82 = por %p80, %p81
    %p84 = scmp.ne.s32.totalorder %s69, %s83
    %p85 = scmp.eq.s32.totalorder %s17, 0
    %p86 = por %p84, %p85
    %s87 = ssub.s32 %s18, %s37
    %s88 = ssub.s32 %s19, %s33
    %s89 = sor.u32 %s87, %s88
    %p90 = scmp.eq.s32.totalorder %s89, 0
    %s92 = sadd.s32 %s91, 1
    %s93 = scalar_select %p90, %s91, %s92
    %p96 = pneg %p90
    %p97 = scmp.eq.s32.totalorder %s11, 1
    %p98 = por %p96, %p97
    %p99 = scmp.ne.s32.totalorder %s91, %s94
    %p100 = scmp.eq.s32.totalorder %s11, 0
    %p101 = por %p99, %p100
    %p102 = scmp.ne.s32.totalorder %s91, %s94
    %p103 = scmp.eq.s32.totalorder %s16, 1
    %p104 = por %p102, %p103
    %p105 = scmp.ne.s32.totalorder %s94, %s95
    %p106 = scmp.eq.s32.totalorder %s16, 0
    %p107 = por %p105, %p106
    %p108 = scmp.ne.s32.totalorder %s94, %s95
    %p109 = scmp.eq.s32.totalorder %s17, 1
    %p110 = por %p108, %p109
    %p112 = scmp.ne.s32.totalorder %s95, %s111
    %p113 = scmp.eq.s32.totalorder %s17, 0
    %p114 = por %p112, %p113
    %s115 = ssub.s32 %s18, %s37
    %s116 = ssub.s32 %s19, %s33
    %s117 = sor.u32 %s115, %s116
    %p118 = scmp.eq.s32.totalorder %s117, 0
    %s120 = sadd.s32 %s119, 1
    %s121 = scalar_select %p118, %s119, %s120
    %p124 = pneg %p118
    %p125 = scmp.eq.s32.totalorder %s11, 1
    %p126 = por %p124, %p125
    %p127 = scmp.ne.s32.totalorder %s119, %s122
    %p128 = scmp.eq.s32.totalorder %s11, 0
    %p129 = por %p127, %p128
    %p130 = scmp.ne.s32.totalorder %s119, %s122
    %p131 = scmp.eq.s32.totalorder %s16, 1
    %p132 = por %p130, %p131
    %p133 = scmp.ne.s32.totalorder %s122, %s123
    %p134 = scmp.eq.s32.totalorder %s16, 0
    %p135 = por %p133, %p134
    %p136 = scmp.ne.s32.totalorder %s122, %s123
    %p137 = scmp.eq.s32.totalorder %s17, 1
    %p138 = por %p136, %p137
    %p140 = scmp.ne.s32.totalorder %s123, %s139
    %p141 = scmp.eq.s32.totalorder %s17, 0
    %p142 = por %p140, %p141
    %s143 = ssub.s32 %s18, %s37
    %s144 = ssub.s32 %s19, %s33
    %s145 = sor.u32 %s143, %s144
    %p146 = scmp.eq.s32.totalorder %s145, 0
    %s148 = sadd.s32 %s147, 1
    %s149 = scalar_select %p146, %s147, %s148
    %p152 = pneg %p146
    %p153 = scmp.eq.s32.totalorder %s11, 1
    %p154 = por %p152, %p153
    %p155 = scmp.ne.s32.totalorder %s147, %s150
    %p156 = scmp.eq.s32.totalorder %s11, 0
    %p157 = por %p155, %p156
    %p158 = scmp.ne.s32.totalorder %s147, %s150
    %p159 = scmp.eq.s32.totalorder %s16, 1
    %p160 = por %p158, %p159
    %p161 = scmp.ne.s32.totalorder %s150, %s151
    %p162 = scmp.eq.s32.totalorder %s16, 0
    %p163 = por %p161, %p162
    %p164 = scmp.ne.s32.totalorder %s150, %s151
    %p165 = scmp.eq.s32.totalorder %s17, 1
    %p166 = por %p164, %p165
    %p168 = scmp.ne.s32.totalorder %s151, %s167
    %p169 = scmp.eq.s32.totalorder %s17, 0
    %p170 = por %p168, %p169
    %p171 = scmp.le.s32.totalorder 1, %s11
    %p172 = scmp.lt.s32.totalorder %s11, 3
    %p173 = pnand %p171, %p172
    %p174 = pneg %p173
    // Predicated region
    $region9: #{basic_block_forward.5} parent=5 // pred_check
      _
    $region10: #{basic_block_forward.5} parent=5 // pred_check_branch
      %176 = sbr.rel (%p173) target = $region12
    $region11: #{basic_block_forward.5} parent=5 // pred_region
      %s177 = ssub.s32 %s11, 1
      // Predicated region
      $region13: #{basic_block_forward.5} parent=11 // pred_check
        %p178 = pneg %p79
      $region14: #{basic_block_forward.5} parent=11 // pred_check_branch
        %180 = sbr.rel (%p178) target = $region16
      $region15: #{basic_block_forward.5} parent=11 // pred_region
        _
      $region16: #{basic_block_forward.5} parent=11 // pred_fallthru
        _
    $region12: #{basic_block_forward.5} parent=5 // pred_fallthru
      _
    %p181 = scmp.lt.s32.totalorder %s11, 2
    // Predicated region
    $region17: #{basic_block_forward.5} parent=5 // pred_check
      %p182 = pneg %p181
    $region18: #{basic_block_forward.5} parent=5 // pred_check_branch
      %184 = sbr.rel (%p182) target = $region20
    $region19: #{basic_block_forward.5} parent=5 // pred_region
      // Predicated region
      $region21: #{basic_block_forward.5} parent=19 // pred_check
        %p185 = pneg %p52
      $region22: #{basic_block_forward.5} parent=19 // pred_check_branch
        %187 = sbr.rel (%p185) target = $region24
      $region23: #{basic_block_forward.5} parent=19 // pred_region
        %s188 = smul.u32 8, %s18
        %p189 = scmp.lt.s32.totalorder %s188, 15
        %s190 = scalar_select %p189, %s188, 15
        %p191 = scmp.lt.s32.totalorder %s20, 0
        %s192 = scalar_select %p191, %s20, 0
        %s193 = sadd.s32 %s192, %s190
        %s194 = smul.addr %s193, 4
        %s195 = scalar_lea.vmem %s0, %s194
        %s196 = smul.u32 8, %s18
      $region24: #{basic_block_forward.5} parent=19 // pred_fallthru
        _
    $region20: #{basic_block_forward.5} parent=5 // pred_fallthru
      _
    %p197 = scmp.le.s32.totalorder 1, %s11
    %p198 = scmp.lt.s32.totalorder %s11, 3
    %p199 = pnand %p197, %p198
    %p200 = pneg %p199
    // Predicated region
    $region25: #{basic_block_forward.5} parent=5 // pred_check
      _
    $region26: #{basic_block_forward.5} parent=5 // pred_check_branch
      %202 = sbr.rel (%p199) target = $region28
    $region27: #{basic_block_forward.5} parent=5 // pred_region
      %s203 = ssub.s32 %s11, 1
      %s204 = smul.u32 8, %s21
      %p205 = scmp.lt.s32.totalorder %s204, 15
      %s206 = scalar_select %p205, %s204, 15
      %p207 = scmp.lt.s32.totalorder %s23, 0
      %s208 = scalar_select %p207, %s23, 0
      %s209 = sadd.s32 %s208, %s206
      %s210 = smul.addr %s209, 4
      %s211 = scalar_lea.vmem %s0, %s210
      %p212 = pneg %p58
      %p213 = pneg %p55
      %p214 = pneg %p79
      %p215 = pneg %p76
      %p216 = pneg %p107
      %p217 = pneg %p104
      %s218 = smul.u32 8, %s21
      %p219 = scmp.lt.s32.totalorder %s218, 15
      %s220 = scalar_select %p219, %s218, 15
      %p221 = scmp.lt.s32.totalorder %s22, 0
      %s222 = scalar_select %p221, %s22, 0
      %s223 = sadd.s32 %s222, %s220
      %s224 = smul.addr %s223, 4
      %s225 = scalar_lea.vmem %s2, %s224
      %p226 = pneg %p135
      %p227 = pneg %p132
      %p228 = scmp.lt.s32.totalorder %s21, 1
      %s229 = scalar_select %p228, %s21, 1
      %p230 = scmp.lt.s32.totalorder %s22, 0
      %s231 = scalar_select %p230, %s22, 0
      %s232 = sadd.s32 %s231, %s229
      %s233 = smul.addr %s232, 8
      %s234 = scalar_lea.vmem %s3, %s233
      %p235 = pneg %p163
      %p236 = pneg %p160
      %p237 = scmp.lt.s32.totalorder %s21, 1
      %s238 = scalar_select %p237, %s21, 1
      %p239 = scmp.lt.s32.totalorder %s22, 0
      %s240 = scalar_select %p239, %s22, 0
      %s241 = sadd.s32 %s240, %s238
      %s242 = smul.addr %s241, 8
      %s243 = scalar_lea.vmem %s4, %s242
      %s244 = smul.u32 8, %s21
      %p245 = scmp.lt.s32.totalorder %s244, 15
      %s246 = scalar_select %p245, %s244, 15
      %p247 = scmp.lt.s32.totalorder %s23, 0
      %s248 = scalar_select %p247, %s23, 0
      %s249 = sadd.s32 %s248, %s246
      %s250 = smul.addr %s249, 4
      %s251 = scalar_lea.vmem %s0, %s250
      %s252 = smul.u32 8, %s21
      %s253 = smul.u32 8, %s21
      %p254 = scmp.lt.s32.totalorder %s253, 15
      %s255 = scalar_select %p254, %s253, 15
      %p256 = scmp.lt.s32.totalorder %s22, 0
      %s257 = scalar_select %p256, %s22, 0
      %s258 = sadd.s32 %s257, %s255
      %s259 = smul.addr %s258, 4
      %s260 = scalar_lea.vmem %s2, %s259
      %s261 = smul.u32 8, %s21
      %p262 = scmp.lt.s32.totalorder %s21, 1
      %s263 = scalar_select %p262, %s21, 1
      %p264 = scmp.lt.s32.totalorder %s22, 0
      %s265 = scalar_select %p264, %s22, 0
      %s266 = sadd.s32 %s265, %s263
      %s267 = smul.addr %s266, 8
      %s268 = scalar_lea.vmem %s3, %s267
      %p269 = scmp.lt.s32.totalorder %s21, 1
      %s270 = scalar_select %p269, %s21, 1
      %p271 = scmp.lt.s32.totalorder %s22, 0
      %s272 = scalar_select %p271, %s22, 0
      %s273 = sadd.s32 %s272, %s270
      %s274 = smul.addr %s273, 8
      %s275 = scalar_lea.vmem %s4, %s274
      %p277 = scmp.eq.s32.totalorder %s23, 0
      // Predicated region
      $region29: #{basic_block_forward.5} parent=27 // pred_check
        %p278 = pneg %p277
      $region30: #{basic_block_forward.5} parent=27 // pred_check_branch
        %280 = sbr.rel (%p278) target = $region32
      $region31: #{basic_block_forward.5} parent=27 // pred_region
        %281 = vst [vmem:[#allocation2] sm:$0xff] 0.0
        %282 = vst [vmem:[#allocation2 + $0x8] sm:$0xff] 0.0
        %283 = vst [vmem:[#allocation2 + $0x10] sm:$0xff] 0.0
        %284 = vst [vmem:[#allocation2 + $0x18] sm:$0xff] 0.0
        %285 = vst [vmem:[#allocation2 + $0x20] sm:$0xff] 0.0
        %286 = vst [vmem:[#allocation2 + $0x28] sm:$0xff] 0.0
        %287 = vst [vmem:[#allocation2 + $0x30] sm:$0xff] 0.0
        %288 = vst [vmem:[#allocation2 + $0x38] sm:$0xff] 0.0
      $region32: #{basic_block_forward.5} parent=27 // pred_fallthru
        _
      %v289 = vld [vmem:[%s1] sm:$0xf]
      %v290 = vld [vmem:[%s1 + $0x4] sm:$0xf]
      %v291 = vld [vmem:[%s1 + $0x8] sm:$0xf]
      %v292 = vld [vmem:[%s1 + $0xc] sm:$0xf]
      %v293 = vld [vmem:[%s1 + $0x10] sm:$0xf]
      %v294 = vld [vmem:[%s1 + $0x14] sm:$0xf]
      %v295 = vld [vmem:[%s1 + $0x18] sm:$0xf]
      %v296 = vld [vmem:[%s1 + $0x1c] sm:$0xf]
      %v297 = vld [vmem:[%s1 + $0x20] sm:$0xf]
      %v298 = vld [vmem:[%s1 + $0x24] sm:$0xf]
      %v299 = vld [vmem:[%s1 + $0x28] sm:$0xf]
      %v300 = vld [vmem:[%s1 + $0x2c] sm:$0xf]
      %v301 = vld [vmem:[%s1 + $0x30] sm:$0xf]
      %v302 = vld [vmem:[%s1 + $0x34] sm:$0xf]
      %v303 = vld [vmem:[%s1 + $0x38] sm:$0xf]
      %v304 = vld [vmem:[%s1 + $0x3c] sm:$0xf]
      %v305 = vld [vmem:[#allocation2] sm:$0xff]
      %v306 = vld [vmem:[#allocation2 + $0x8] sm:$0xff]
      %v307 = vld [vmem:[#allocation2 + $0x10] sm:$0xff]
      %v308 = vld [vmem:[#allocation2 + $0x18] sm:$0xff]
      %v309 = vld [vmem:[#allocation2 + $0x20] sm:$0xff]
      %v310 = vld [vmem:[#allocation2 + $0x28] sm:$0xff]
      %v311 = vld [vmem:[#allocation2 + $0x30] sm:$0xff]
      %v312 = vld [vmem:[#allocation2 + $0x38] sm:$0xff]
      %v313 = vld [vmem:[%s251] sm:$0xf]
      %v314 = vld [vmem:[%s251 + $0x4] sm:$0xf]
      %v315 = vld [vmem:[%s251 + $0x8] sm:$0xf]
      %v316 = vld [vmem:[%s251 + $0xc] sm:$0xf]
      %v317 = vld [vmem:[%s251 + $0x10] sm:$0xf]
      %v318 = vld [vmem:[%s251 + $0x14] sm:$0xf]
      %v319 = vld [vmem:[%s251 + $0x18] sm:$0xf]
      %v320 = vld [vmem:[%s251 + $0x1c] sm:$0xf]
      %v329 = vunpack.c.l.b16 %v313
      %v330 = vunpack.c.l.b16 %v314
      %v331 = vunpack.c.l.b16 %v315
      %v332 = vunpack.c.l.b16 %v316
      %v333 = vunpack.c.l.b16 %v317
      %v334 = vunpack.c.l.b16 %v318
      %v335 = vunpack.c.l.b16 %v319
      %v336 = vunpack.c.l.b16 %v320
      %v337 = vpack.c.b16 %v330, %v329
      %v338 = vpack.c.b16 %v332, %v331
      %v339 = vpack.c.b16 %v334, %v333
      %v340 = vpack.c.b16 %v336, %v335
      %v361 = vunpack.c.l.b16 %v289
      %v362 = vunpack.c.l.b16 %v290
      %v363 = vunpack.c.l.b16 %v291
      %v364 = vunpack.c.l.b16 %v292
      %v365 = vunpack.c.l.b16 %v293
      %v366 = vunpack.c.l.b16 %v294
      %v367 = vunpack.c.l.b16 %v295
      %v368 = vunpack.c.l.b16 %v296
      %v369 = vunpack.c.l.b16 %v297
      %v370 = vunpack.c.l.b16 %v298
      %v371 = vunpack.c.l.b16 %v299
      %v372 = vunpack.c.l.b16 %v300
      %v373 = vunpack.c.l.b16 %v301
      %v374 = vunpack.c.l.b16 %v302
      %v375 = vunpack.c.l.b16 %v303
      %v376 = vunpack.c.l.b16 %v304
      %v377 = vpack.c.b16 %v362, %v361
      %v378 = vpack.c.b16 %v364, %v363
      %v379 = vpack.c.b16 %v366, %v365
      %v380 = vpack.c.b16 %v368, %v367
      %v381 = vpack.c.b16 %v370, %v369
      %v382 = vpack.c.b16 %v372, %v371
      %v383 = vpack.c.b16 %v374, %v373
      %v384 = vpack.c.b16 %v376, %v375
      %393 = vmatprep.subr.bf16.mxu0 0
      %394 = vmatpush1.bf16.msra.mxu0 %v377
      %395 = vmatprep.subr.bf16.mxu0 0
      %396 = vmatpush1.bf16.msra.mxu0 %v378
      %397 = vmatprep.subr.bf16.mxu0 0
      %398 = vmatpush1.bf16.msra.mxu0 %v379
      %399 = vmatprep.subr.bf16.mxu0 0
      %400 = vmatpush1.bf16.msra.mxu0 %v380
      %401 = vmatprep.subr.bf16.mxu0 0
      %402 = vmatpush1.bf16.msra.mxu0 %v381
      %403 = vmatprep.subr.bf16.mxu0 0
      %404 = vmatpush1.bf16.msra.mxu0 %v382
      %405 = vmatprep.subr.bf16.mxu0 0
      %406 = vmatpush1.bf16.msra.mxu0 %v383
      %407 = vmatprep.subr.bf16.mxu0 0
      %408 = vmatpush1.bf16.msra.mxu0 %v384
      %409 = vmatprep.subr.bf16.mxu0 0
      %410 = vmatpush1.bf16.msra.mxu0 0
      %411 = vmatprep.subr.bf16.mxu0 0
      %412 = vmatpush1.bf16.msra.mxu0 0
      %413 = vmatprep.subr.bf16.mxu0 0
      %414 = vmatpush1.bf16.msra.mxu0 0
      %415 = vmatprep.subr.bf16.mxu0 0
      %416 = vmatpush1.bf16.msra.mxu0 0
      %417 = vmatprep.subr.bf16.mxu0 0
      %418 = vmatpush1.bf16.msra.mxu0 0
      %419 = vmatprep.subr.bf16.mxu0 0
      %420 = vmatpush1.bf16.msra.mxu0 0
      %421 = vmatprep.subr.bf16.mxu0 0
      %422 = vmatpush1.bf16.msra.mxu0 0
      %423 = vmatprep.subr.bf16.mxu0 0
      %424 = vmatpush1.bf16.msra.mxu0 0
      %425 = vmatprep.mubr.bf16.mxu0 0
      %426 = vmatmul.mubr.bf16.gmra.mrb[0].mxu0 %v337
      %v427 = vpop.f32.mrb[0].mxu0
      %v428 = vadd.f32 0.0, %v427
      %v429 = vpop.f32.mrb[0].mxu0
      %v430 = vpop.f32.mrb[0].mxu0
      %v431 = vadd.f32 0.0, %v430
      %v432 = vpop.f32.mrb[0].mxu0
      %433 = vmatprep.mubr.bf16.mxu0 0
      %434 = vmatmul.mubr.bf16.gmra.mrb[0].mxu0 %v338
      %v435 = vpop.f32.mrb[0].mxu0
      %v436 = vadd.f32 0.0, %v435
      %v437 = vpop.f32.mrb[0].mxu0
      %v438 = vpop.f32.mrb[0].mxu0
      %v439 = vadd.f32 0.0, %v438
      %v440 = vpop.f32.mrb[0].mxu0
      %441 = vmatprep.mubr.bf16.mxu0 0
      %442 = vmatmul.mubr.bf16.gmra.mrb[0].mxu0 %v339
      %v443 = vpop.f32.mrb[0].mxu0
      %v444 = vadd.f32 0.0, %v443
      %v445 = vpop.f32.mrb[0].mxu0
      %v446 = vpop.f32.mrb[0].mxu0
      %v447 = vadd.f32 0.0, %v446
      %v448 = vpop.f32.mrb[0].mxu0
      %449 = vmatprep.mubr.bf16.mxu0 0
      %450 = vmatmul.mubr.bf16.gmra.mrb[0].mxu0 %v340
      %v451 = vpop.f32.mrb[0].mxu0
      %v452 = vadd.f32 0.0, %v451
      %v453 = vpop.f32.mrb[0].mxu0
      %v454 = vpop.f32.mrb[0].mxu0
      %v455 = vadd.f32 0.0, %v454
      %v456 = vpop.f32.mrb[0].mxu0
      %457 = vdwg.mxu0
      %v458 = vadd.f32 %v305, %v428
      %v459 = vadd.f32 %v306, %v431
      %v460 = vadd.f32 %v307, %v436
      %v461 = vadd.f32 %v308, %v439
      %v462 = vadd.f32 %v309, %v444
      %v463 = vadd.f32 %v310, %v447
      %v464 = vadd.f32 %v311, %v452
      %v465 = vadd.f32 %v312, %v455
      %466 = vst [vmem:[#allocation2] sm:$0xff] %v458
      %467 = vst [vmem:[#allocation2 + $0x8] sm:$0xff] %v459
      %468 = vst [vmem:[#allocation2 + $0x10] sm:$0xff] %v460
      %469 = vst [vmem:[#allocation2 + $0x18] sm:$0xff] %v461
      %470 = vst [vmem:[#allocation2 + $0x20] sm:$0xff] %v462
      %471 = vst [vmem:[#allocation2 + $0x28] sm:$0xff] %v463
      %472 = vst [vmem:[#allocation2 + $0x30] sm:$0xff] %v464
      %473 = vst [vmem:[#allocation2 + $0x38] sm:$0xff] %v465
      // Predicated region
      $region33: #{basic_block_forward.5} parent=27 // pred_check
        %p474 = pneg %p277
      $region34: #{basic_block_forward.5} parent=27 // pred_check_branch
        %476 = sbr.rel (%p474) target = $region36
      $region35: #{basic_block_forward.5} parent=27 // pred_region
        %v477 = vld [vmem:[#allocation2] sm:$0xff]
        %v478 = vld [vmem:[#allocation2 + $0x8] sm:$0xff]
        %v479 = vld [vmem:[#allocation2 + $0x10] sm:$0xff]
        %v480 = vld [vmem:[#allocation2 + $0x18] sm:$0xff]
        %v481 = vld [vmem:[#allocation2 + $0x20] sm:$0xff]
        %v482 = vld [vmem:[#allocation2 + $0x28] sm:$0xff]
        %v483 = vld [vmem:[#allocation2 + $0x30] sm:$0xff]
        %v484 = vld [vmem:[#allocation2 + $0x38] sm:$0xff]
        %v485 = vpack.c.bf16 %v478, %v477
        %v486 = vpack.c.bf16 %v480, %v479
        %v487 = vpack.c.bf16 %v482, %v481
        %v488 = vpack.c.bf16 %v484, %v483
        %v493 = vunpack.c.l.b16 %v485
        %v494 = vunpack.c.h.b16 %v485
        %v495 = vunpack.c.l.b16 %v486
        %v496 = vunpack.c.h.b16 %v486
        %v497 = vunpack.c.l.b16 %v487
        %v498 = vunpack.c.h.b16 %v487
        %v499 = vunpack.c.l.b16 %v488
        %v500 = vunpack.c.h.b16 %v488
        %v501 = vpack.c.b16 %v493, %v493
        %v502 = vpack.c.b16 %v494, %v494
        %v503 = vpack.c.b16 %v495, %v495
        %v504 = vpack.c.b16 %v496, %v496
        %v505 = vpack.c.b16 %v497, %v497
        %v506 = vpack.c.b16 %v498, %v498
        %v507 = vpack.c.b16 %v499, %v499
        %v508 = vpack.c.b16 %v500, %v500
        %517 = vst [vmem:[%s260] sm:$0xf] %v501
        %518 = vst [vmem:[%s260 + $0x4] sm:$0xf] %v502
        %519 = vst [vmem:[%s260 + $0x8] sm:$0xf] %v503
        %520 = vst [vmem:[%s260 + $0xc] sm:$0xf] %v504
        %521 = vst [vmem:[%s260 + $0x10] sm:$0xf] %v505
        %522 = vst [vmem:[%s260 + $0x14] sm:$0xf] %v506
        %523 = vst [vmem:[%s260 + $0x18] sm:$0xf] %v507
        %524 = vst [vmem:[%s260 + $0x1c] sm:$0xf] %v508
        %v525 = vadd.f32 %v477, %v478
        %v526 = vadd.f32 %v525, %v479
        %v527 = vadd.f32 %v526, %v480
        %v528 = vadd.f32 %v527, %v481
        %v529 = vadd.f32 %v528, %v482
        %v530 = vadd.f32 %v529, %v483
        %v531 = vadd.f32 %v530, %v484
        %v532 = vrot.slane %v531, 4
        %v533 = vadd.f32 %v531, %v532
        %v534 = vrot.slane %v533, 2
        %v535 = vadd.f32 %v533, %v534
        %v536 = vrot.slane %v535, 1
        %v537 = vadd.f32 %v535, %v536
        %v538 = vmul.f32 %v477, %v477
        %v539 = vmul.f32 %v478, %v478
        %v540 = vmul.f32 %v479, %v479
        %v541 = vmul.f32 %v480, %v480
        %v542 = vmul.f32 %v481, %v481
        %v543 = vmul.f32 %v482, %v482
        %v544 = vmul.f32 %v483, %v483
        %v545 = vmul.f32 %v484, %v484
        %v546 = vadd.f32 %v538, %v539
        %v547 = vadd.f32 %v546, %v540
        %v548 = vadd.f32 %v547, %v541
        %v549 = vadd.f32 %v548, %v542
        %v550 = vadd.f32 %v549, %v543
        %v551 = vadd.f32 %v550, %v544
        %v552 = vadd.f32 %v551, %v545
        %v553 = vrot.slane %v552, 4
        %v554 = vadd.f32 %v552, %v553
        %v555 = vrot.slane %v554, 2
        %v556 = vadd.f32 %v554, %v555
        %v557 = vrot.slane %v556, 1
        %v558 = vadd.f32 %v556, %v557
        %559 = vst [vmem:[%s268] sm:$0xff] %v537
        %560 = vst [vmem:[%s275] sm:$0xff] %v558
      $region36: #{basic_block_forward.5} parent=27 // pred_fallthru
        _
      %s561 = smul.u32 8, %s21
      %p562 = scmp.lt.s32.totalorder %s561, 15
      %s563 = scalar_select %p562, %s561, 15
      %p564 = scmp.lt.s32.totalorder %s22, 0
      %s565 = scalar_select %p564, %s22, 0
      %s566 = sadd.s32 %s565, %s563
      %s567 = smul.addr %s566, 4
      %s568 = scalar_lea.vmem %s2, %s567
      %p569 = scmp.lt.s32.totalorder %s21, 1
      %s570 = scalar_select %p569, %s21, 1
      %p571 = scmp.lt.s32.totalorder %s22, 0
      %s572 = scalar_select %p571, %s22, 0
      %s573 = sadd.s32 %s572, %s570
      %s574 = smul.addr %s573, 8
      %s575 = scalar_lea.vmem %s3, %s574
      %p576 = scmp.lt.s32.totalorder %s21, 1
      %s577 = scalar_select %p576, %s21, 1
      %p578 = scmp.lt.s32.totalorder %s22, 0
      %s579 = scalar_select %p578, %s22, 0
      %s580 = sadd.s32 %s579, %s577
      %s581 = smul.addr %s580, 8
      %s582 = scalar_lea.vmem %s4, %s581
      // Predicated region
      $region37: #{basic_block_forward.5} parent=27 // pred_check
        %p583 = pneg %p104
      $region38: #{basic_block_forward.5} parent=27 // pred_check_branch
        %585 = sbr.rel (%p583) target = $region40
      $region39: #{basic_block_forward.5} parent=27 // pred_region
        %s586 = smul.u32 8, %s21
      $region40: #{basic_block_forward.5} parent=27 // pred_fallthru
        _
      // Predicated region
      $region41: #{basic_block_forward.5} parent=27 // pred_check
        %p587 = pneg %p132
      $region42: #{basic_block_forward.5} parent=27 // pred_check_branch
        %589 = sbr.rel (%p587) target = $region44
      $region43: #{basic_block_forward.5} parent=27 // pred_region
        _
      $region44: #{basic_block_forward.5} parent=27 // pred_fallthru
        _
      // Predicated region
      $region45: #{basic_block_forward.5} parent=27 // pred_check
        %p590 = pneg %p160
      $region46: #{basic_block_forward.5} parent=27 // pred_check_branch
        %592 = sbr.rel (%p590) target = $region48
      $region47: #{basic_block_forward.5} parent=27 // pred_region
        _
      $region48: #{basic_block_forward.5} parent=27 // pred_fallthru
        _
    $region28: #{basic_block_forward.5} parent=5 // pred_fallthru
      _
    %p593 = scmp.le.s32.totalorder 2, %s11
    // Predicated region
    $region49: #{basic_block_forward.5} parent=5 // pred_check
      %p594 = pneg %p593
    $region50: #{basic_block_forward.5} parent=5 // pred_check_branch
      %596 = sbr.rel (%p594) target = $region52
    $region51: #{basic_block_forward.5} parent=5 // pred_region
      %s597 = ssub.s32 %s11, 2
      // Predicated region
      $region53: #{basic_block_forward.5} parent=51 // pred_check
        %p598 = pneg %p110
      $region54: #{basic_block_forward.5} parent=51 // pred_check_branch
        %600 = sbr.rel (%p598) target = $region56
      $region55: #{basic_block_forward.5} parent=51 // pred_region
        %s601 = smul.u32 8, %s24
        %p602 = scmp.lt.s32.totalorder %s601, 15
        %s603 = scalar_select %p602, %s601, 15
        %p604 = scmp.lt.s32.totalorder %s25, 0
        %s605 = scalar_select %p604, %s25, 0
        %s606 = sadd.s32 %s605, %s603
        %s607 = smul.addr %s606, 4
        %s608 = scalar_lea.vmem %s2, %s607
      $region56: #{basic_block_forward.5} parent=51 // pred_fallthru
        _
      // Predicated region
      $region57: #{basic_block_forward.5} parent=51 // pred_check
        %p609 = pneg %p138
      $region58: #{basic_block_forward.5} parent=51 // pred_check_branch
        %611 = sbr.rel (%p609) target = $region60
      $region59: #{basic_block_forward.5} parent=51 // pred_region
        %p612 = scmp.lt.s32.totalorder %s24, 1
        %s613 = scalar_select %p612, %s24, 1
        %p614 = scmp.lt.s32.totalorder %s25, 0
        %s615 = scalar_select %p614, %s25, 0
        %s616 = sadd.s32 %s615, %s613
        %s617 = smul.addr %s616, 8
        %s618 = scalar_lea.vmem %s3, %s617
      $region60: #{basic_block_forward.5} parent=51 // pred_fallthru
        _
      // Predicated region
      $region61: #{basic_block_forward.5} parent=51 // pred_check
        %p619 = pneg %p166
      $region62: #{basic_block_forward.5} parent=51 // pred_check_branch
        %621 = sbr.rel (%p619) target = $region64
      $region63: #{basic_block_forward.5} parent=51 // pred_region
        %p622 = scmp.lt.s32.totalorder %s24, 1
        %s623 = scalar_select %p622, %s24, 1
        %p624 = scmp.lt.s32.totalorder %s25, 0
        %s625 = scalar_select %p624, %s25, 0
        %s626 = sadd.s32 %s625, %s623
        %s627 = smul.addr %s626, 8
        %s628 = scalar_lea.vmem %s4, %s627
      $region64: #{basic_block_forward.5} parent=51 // pred_fallthru
        _
    $region52: #{basic_block_forward.5} parent=5 // pred_fallthru
      _
  $region6: #{basic_block_forward.5} parent=0 // loop_footer
    %s15 = sadd.s32 1, %s11
  $region7: #{basic_block_forward.5} parent=0 // loop_footer_branch
    %10 = sbr.rel target = $region3
  $region8: #{basic_block_forward.5} parent=0 // loop_exit
    _

// kernel: basic_block_forward.9
$region0: #{basic_block_forward.9}
  #allocation0 [shape = 'u32[]', space=smem, size = 0x4, offset = 0x4, fixed_abs, tag = 'smem constant byte address 0x4 - core index']
  #allocation1 [shape = 'u32[144,128]{1,0:T(1,128)}', space=vmem, size = 0x12000, scoped, tag = 'internal scratch']
  %s0 = inlined_call_operand.vmem [shape: bf16[128,128], index: 0, kind: input, shape index: {}]
  %s1 = inlined_call_operand.vmem [shape: bf16[128,128], index: 1, kind: input, shape index: {}]
  %s2 = inlined_call_operand.vmem [shape: f32[1,128], index: 2, kind: input, shape index: {}]
  %s3 = inlined_call_operand.vmem [shape: f32[1,128], index: 3, kind: input, shape index: {}]
  %s4 = inlined_call_operand.vmem [shape: f32[1,128], index: 4, kind: input, shape index: {}]
  %s5 = inlined_call_operand.vmem [shape: f32[1,128], index: 5, kind: input, shape index: {}]
  %s6 = inlined_call_operand.vmem [shape: bf16[128,128], index: 6, kind: output, shape index: {}]
  %s7 = sld [smem:[#allocation0]]
  $region34: #{basic_block_forward.9} parent=0
    _
  %s9 = ssub.s32 1, %s7
  %s10 = scalar_select 0, %s9, %s7
  // Predicated region
  $region2: #{basic_block_forward.9} parent=0 // pred_check
    _
  $region3: #{basic_block_forward.9} parent=0 // pred_check_branch
    %12 = sbr.rel (0) target = $region5
  $region4: #{basic_block_forward.9} parent=0 // pred_region
    _
  $region5: #{basic_block_forward.9} parent=0 // pred_fallthru
    _
  // Predicated region
  $region6: #{basic_block_forward.9} parent=0 // pred_check
    _
  $region7: #{basic_block_forward.9} parent=0 // pred_check_branch
    %14 = sbr.rel (0) target = $region9
  $region8: #{basic_block_forward.9} parent=0 // pred_region
    _
  $region9: #{basic_block_forward.9} parent=0 // pred_fallthru
    _
  // Predicated region
  $region10: #{basic_block_forward.9} parent=0 // pred_check
    _
  $region11: #{basic_block_forward.9} parent=0 // pred_check_branch
    %16 = sbr.rel (0) target = $region13
  $region12: #{basic_block_forward.9} parent=0 // pred_region
    _
  $region13: #{basic_block_forward.9} parent=0 // pred_fallthru
    _
  // Predicated region
  $region14: #{basic_block_forward.9} parent=0 // pred_check
    _
  $region15: #{basic_block_forward.9} parent=0 // pred_check_branch
    %18 = sbr.rel (0) target = $region17
  $region16: #{basic_block_forward.9} parent=0 // pred_region
    _
  $region17: #{basic_block_forward.9} parent=0 // pred_fallthru
    _
  // Predicated region
  $region18: #{basic_block_forward.9} parent=0 // pred_check
    _
  $region19: #{basic_block_forward.9} parent=0 // pred_check_branch
    %20 = sbr.rel (0) target = $region21
  $region20: #{basic_block_forward.9} parent=0 // pred_region
    _
  $region21: #{basic_block_forward.9} parent=0 // pred_fallthru
    _
  // Predicated region
  $region22: #{basic_block_forward.9} parent=0 // pred_check
    _
  $region23: #{basic_block_forward.9} parent=0 // pred_check_branch
    %22 = sbr.rel (0) target = $region25
  $region24: #{basic_block_forward.9} parent=0 // pred_region
    _
  $region25: #{basic_block_forward.9} parent=0 // pred_fallthru
    _
  %v23 = vld [vmem:[%s0] sm:$0xf]
  %v24 = vld [vmem:[%s0 + $0x4] sm:$0xf]
  %v25 = vld [vmem:[%s0 + $0x8] sm:$0xf]
  %v26 = vld [vmem:[%s0 + $0xc] sm:$0xf]
  %v27 = vld [vmem:[%s0 + $0x10] sm:$0xf]
  %v28 = vld [vmem:[%s0 + $0x14] sm:$0xf]
  %v29 = vld [vmem:[%s0 + $0x18] sm:$0xf]
  %v30 = vld [vmem:[%s0 + $0x1c] sm:$0xf]
  %v31 = vld [vmem:[%s0 + $0x20] sm:$0xf]
  %v32 = vld [vmem:[%s0 + $0x24] sm:$0xf]
  %v33 = vld [vmem:[%s0 + $0x28] sm:$0xf]
  %v34 = vld [vmem:[%s0 + $0x2c] sm:$0xf]
  %v35 = vld [vmem:[%s0 + $0x30] sm:$0xf]
  %v36 = vld [vmem:[%s0 + $0x34] sm:$0xf]
  %v37 = vld [vmem:[%s0 + $0x38] sm:$0xf]
  %v38 = vld [vmem:[%s0 + $0x3c] sm:$0xf]
  %v39 = vunpack.c.l.bf16 %v23
  %v40 = vunpack.c.l.bf16 %v24
  %v41 = vunpack.c.l.bf16 %v25
  %v42 = vunpack.c.l.bf16 %v26
  %v43 = vunpack.c.l.bf16 %v27
  %v44 = vunpack.c.l.bf16 %v28
  %v45 = vunpack.c.l.bf16 %v29
  %v46 = vunpack.c.l.bf16 %v30
  %v47 = vunpack.c.l.bf16 %v31
  %v48 = vunpack.c.l.bf16 %v32
  %v49 = vunpack.c.l.bf16 %v33
  %v50 = vunpack.c.l.bf16 %v34
  %v51 = vunpack.c.l.bf16 %v35
  %v52 = vunpack.c.l.bf16 %v36
  %v53 = vunpack.c.l.bf16 %v37
  %v54 = vunpack.c.l.bf16 %v38
  %v55 = vld [vmem:[%s2] sm:$0x1]
  %v57 = vlaneseq
  %v58 = vshrl.u32 %v57, 7
  %v59 = vsub.s32 0, %v58
  %v60 = vrot.slane %v55, %v59
  %v62 = vmul.f32 %v39, %v60
  %v63 = vmul.f32 %v40, %v60
  %v64 = vmul.f32 %v41, %v60
  %v65 = vmul.f32 %v42, %v60
  %v66 = vmul.f32 %v43, %v60
  %v67 = vmul.f32 %v44, %v60
  %v68 = vmul.f32 %v45, %v60
  %v69 = vmul.f32 %v46, %v60
  %v70 = vmul.f32 %v47, %v60
  %v71 = vmul.f32 %v48, %v60
  %v72 = vmul.f32 %v49, %v60
  %v73 = vmul.f32 %v50, %v60
  %v74 = vmul.f32 %v51, %v60
  %v75 = vmul.f32 %v52, %v60
  %v76 = vmul.f32 %v53, %v60
  %v77 = vmul.f32 %v54, %v60
  %v78 = vld [vmem:[%s3] sm:$0x1]
  %v80 = vlaneseq
  %v81 = vshrl.u32 %v80, 7
  %v82 = vsub.s32 0, %v81
  %v83 = vrot.slane %v78, %v82
  %v85 = vadd.f32 %v62, %v83
  %v86 = vadd.f32 %v63, %v83
  %v87 = vadd.f32 %v64, %v83
  %v88 = vadd.f32 %v65, %v83
  %v89 = vadd.f32 %v66, %v83
  %v90 = vadd.f32 %v67, %v83
  %v91 = vadd.f32 %v68, %v83
  %v92 = vadd.f32 %v69, %v83
  %v93 = vadd.f32 %v70, %v83
  %v94 = vadd.f32 %v71, %v83
  %v95 = vadd.f32 %v72, %v83
  %v96 = vadd.f32 %v73, %v83
  %v97 = vadd.f32 %v74, %v83
  %v98 = vadd.f32 %v75, %v83
  %v99 = vadd.f32 %v76, %v83
  %v100 = vadd.f32 %v77, %v83
  %v101 = vld [vmem:[%s1] sm:$0xf]
  %v102 = vld [vmem:[%s1 + $0x4] sm:$0xf]
  %v103 = vld [vmem:[%s1 + $0x8] sm:$0xf]
  %v104 = vld [vmem:[%s1 + $0xc] sm:$0xf]
  %v105 = vld [vmem:[%s1 + $0x10] sm:$0xf]
  %v106 = vld [vmem:[%s1 + $0x14] sm:$0xf]
  %v107 = vld [vmem:[%s1 + $0x18] sm:$0xf]
  %v108 = vld [vmem:[%s1 + $0x1c] sm:$0xf]
  %v109 = vld [vmem:[%s1 + $0x20] sm:$0xf]
  %v110 = vld [vmem:[%s1 + $0x24] sm:$0xf]
  %v111 = vld [vmem:[%s1 + $0x28] sm:$0xf]
  %v112 = vld [vmem:[%s1 + $0x2c] sm:$0xf]
  %v113 = vld [vmem:[%s1 + $0x30] sm:$0xf]
  %v114 = vld [vmem:[%s1 + $0x34] sm:$0xf]
  %v115 = vld [vmem:[%s1 + $0x38] sm:$0xf]
  %v116 = vld [vmem:[%s1 + $0x3c] sm:$0xf]
  %v117 = vunpack.c.l.bf16 %v101
  %v118 = vunpack.c.l.bf16 %v102
  %v119 = vunpack.c.l.bf16 %v103
  %v120 = vunpack.c.l.bf16 %v104
  %v121 = vunpack.c.l.bf16 %v105
  %v122 = vunpack.c.l.bf16 %v106
  %v123 = vunpack.c.l.bf16 %v107
  %v124 = vunpack.c.l.bf16 %v108
  %v125 = vunpack.c.l.bf16 %v109
  %v126 = vunpack.c.l.bf16 %v110
  %v127 = vunpack.c.l.bf16 %v111
  %v128 = vunpack.c.l.bf16 %v112
  %v129 = vunpack.c.l.bf16 %v113
  %v130 = vunpack.c.l.bf16 %v114
  %v131 = vunpack.c.l.bf16 %v115
  %v132 = vunpack.c.l.bf16 %v116
  %v133 = vld [vmem:[%s4] sm:$0x1]
  %v135 = vlaneseq
  %v136 = vshrl.u32 %v135, 7
  %v137 = vsub.s32 0, %v136
  %v138 = vrot.slane %v133, %v137
  %v140 = vmul.f32 %v117, %v138
  %v141 = vmul.f32 %v118, %v138
  %v142 = vmul.f32 %v119, %v138
  %v143 = vmul.f32 %v120, %v138
  %v144 = vmul.f32 %v121, %v138
  %v145 = vmul.f32 %v122, %v138
  %v146 = vmul.f32 %v123, %v138
  %v147 = vmul.f32 %v124, %v138
  %v148 = vmul.f32 %v125, %v138
  %v149 = vmul.f32 %v126, %v138
  %v150 = vmul.f32 %v127, %v138
  %v151 = vmul.f32 %v128, %v138
  %v152 = vmul.f32 %v129, %v138
  %v153 = vmul.f32 %v130, %v138
  %v154 = vmul.f32 %v131, %v138
  %v155 = vmul.f32 %v132, %v138
  %v156 = vadd.f32 %v85, %v140
  %v157 = vadd.f32 %v86, %v141
  %v158 = vadd.f32 %v87, %v142
  %v159 = vadd.f32 %v88, %v143
  %v160 = vadd.f32 %v89, %v144
  %v161 = vadd.f32 %v90, %v145
  %v162 = vadd.f32 %v91, %v146
  %v163 = vadd.f32 %v92, %v147
  %v164 = vadd.f32 %v93, %v148
  %v165 = vadd.f32 %v94, %v149
  %v166 = vadd.f32 %v95, %v150
  %v167 = vadd.f32 %v96, %v151
  %v168 = vadd.f32 %v97, %v152
  %v169 = vadd.f32 %v98, %v153
  %v170 = vadd.f32 %v99, %v154
  %v171 = vadd.f32 %v100, %v155
  %v172 = vld [vmem:[%s5] sm:$0x1]
  %v174 = vlaneseq
  %v175 = vshrl.u32 %v174, 7
  %v176 = vsub.s32 0, %v175
  %v177 = vrot.slane %v172, %v176
  %v179 = vadd.f32 %v156, %v177
  %v180 = vadd.f32 %v157, %v177
  %v181 = vadd.f32 %v158, %v177
  %v182 = vadd.f32 %v159, %v177
  %v183 = vadd.f32 %v160, %v177
  %v184 = vadd.f32 %v161, %v177
  %v185 = vadd.f32 %v162, %v177
  %v186 = vadd.f32 %v163, %v177
  %v187 = vadd.f32 %v164, %v177
  %v188 = vadd.f32 %v165, %v177
  %v189 = vadd.f32 %v166, %v177
  %v190 = vadd.f32 %v167, %v177
  %v191 = vadd.f32 %v168, %v177
  %v192 = vadd.f32 %v169, %v177
  %v193 = vadd.f32 %v170, %v177
  %v194 = vadd.f32 %v171, %v177
  %v195 = vmax.f32 %v179, 0.0
  %v196 = vmax.f32 %v180, 0.0
  %v197 = vmax.f32 %v181, 0.0
  %v198 = vmax.f32 %v182, 0.0
  %v199 = vmax.f32 %v183, 0.0
  %v200 = vmax.f32 %v184, 0.0
  %v201 = vmax.f32 %v185, 0.0
  %v202 = vmax.f32 %v186, 0.0
  %v203 = vmax.f32 %v187, 0.0
  %v204 = vmax.f32 %v188, 0.0
  %v205 = vmax.f32 %v189, 0.0
  %v206 = vmax.f32 %v190, 0.0
  %v207 = vmax.f32 %v191, 0.0
  %v208 = vmax.f32 %v192, 0.0
  %v209 = vmax.f32 %v193, 0.0
  %v210 = vmax.f32 %v194, 0.0
  %v211 = vpack.c.bf16 %v196, %v195
  %v212 = vpack.c.bf16 %v198, %v197
  %v213 = vpack.c.bf16 %v200, %v199
  %v214 = vpack.c.bf16 %v202, %v201
  %v215 = vpack.c.bf16 %v204, %v203
  %v216 = vpack.c.bf16 %v206, %v205
  %v217 = vpack.c.bf16 %v208, %v207
  %v218 = vpack.c.bf16 %v210, %v209
  %v227 = vunpack.c.l.b16 %v211
  %v228 = vunpack.c.h.b16 %v211
  %v229 = vunpack.c.l.b16 %v212
  %v230 = vunpack.c.h.b16 %v212
  %v231 = vunpack.c.l.b16 %v213
  %v232 = vunpack.c.h.b16 %v213
  %v233 = vunpack.c.l.b16 %v214
  %v234 = vunpack.c.h.b16 %v214
  %v235 = vunpack.c.l.b16 %v215
  %v236 = vunpack.c.h.b16 %v215
  %v237 = vunpack.c.l.b16 %v216
  %v238 = vunpack.c.h.b16 %v216
  %v239 = vunpack.c.l.b16 %v217
  %v240 = vunpack.c.h.b16 %v217
  %v241 = vunpack.c.l.b16 %v218
  %v242 = vunpack.c.h.b16 %v218
  %v243 = vpack.c.b16 %v227, %v227
  %v244 = vpack.c.b16 %v228, %v228
  %v245 = vpack.c.b16 %v229, %v229
  %v246 = vpack.c.b16 %v230, %v230
  %v247 = vpack.c.b16 %v231, %v231
  %v248 = vpack.c.b16 %v232, %v232
  %v249 = vpack.c.b16 %v233, %v233
  %v250 = vpack.c.b16 %v234, %v234
  %v251 = vpack.c.b16 %v235, %v235
  %v252 = vpack.c.b16 %v236, %v236
  %v253 = vpack.c.b16 %v237, %v237
  %v254 = vpack.c.b16 %v238, %v238
  %v255 = vpack.c.b16 %v239, %v239
  %v256 = vpack.c.b16 %v240, %v240
  %v257 = vpack.c.b16 %v241, %v241
  %v258 = vpack.c.b16 %v242, %v242
  %275 = vst [vmem:[%s6] sm:$0xf] %v243
  %276 = vst [vmem:[%s6 + $0x4] sm:$0xf] %v244
  %277 = vst [vmem:[%s6 + $0x8] sm:$0xf] %v245
  %278 = vst [vmem:[%s6 + $0xc] sm:$0xf] %v246
  %279 = vst [vmem:[%s6 + $0x10] sm:$0xf] %v247
  %280 = vst [vmem:[%s6 + $0x14] sm:$0xf] %v248
  %281 = vst [vmem:[%s6 + $0x18] sm:$0xf] %v249
  %282 = vst [vmem:[%s6 + $0x1c] sm:$0xf] %v250
  %283 = vst [vmem:[%s6 + $0x20] sm:$0xf] %v251
  %284 = vst [vmem:[%s6 + $0x24] sm:$0xf] %v252
  %285 = vst [vmem:[%s6 + $0x28] sm:$0xf] %v253
  %286 = vst [vmem:[%s6 + $0x2c] sm:$0xf] %v254
  %287 = vst [vmem:[%s6 + $0x30] sm:$0xf] %v255
  %288 = vst [vmem:[%s6 + $0x34] sm:$0xf] %v256
  %289 = vst [vmem:[%s6 + $0x38] sm:$0xf] %v257
  %290 = vst [vmem:[%s6 + $0x3c] sm:$0xf] %v258
  // Predicated region
  $region26: #{basic_block_forward.9} parent=0 // pred_check
    _
  $region27: #{basic_block_forward.9} parent=0 // pred_check_branch
    %292 = sbr.rel (0) target = $region29
  $region28: #{basic_block_forward.9} parent=0 // pred_region
    _
  $region29: #{basic_block_forward.9} parent=0 // pred_fallthru
    _
  // Predicated region
  $region30: #{basic_block_forward.9} parent=0 // pred_check
    _
  $region31: #{basic_block_forward.9} parent=0 // pred_check_branch
    %294 = sbr.rel (0) target = $region33
  $region32: #{basic_block_forward.9} parent=0 // pred_region
    _
  $region33: #{basic_block_forward.9} parent=0 // pred_fallthru
    _

</llo_original>
